<compile_context>
chip_gen: v7x
topology: tpu7x:2x2x1
jax: 0.10.0
libtpu: 0.0.40
codegen_flags: <defaults>
</compile_context>

<pallas_src>
import functools

import jax
import jax.numpy as jnp
from jax.experimental import pallas as pl
from jax.experimental.pallas import tpu as pltpu

IN_DIM, HIDDEN, OUT_DIM = 1000, 512, 6
_LANE = 128
_SUBLANE = 8
# 1024-row tile: x f32 (2 x 4 MiB) + weights bf16 (2 x 1.7 MiB) + out bf16
# (2 x 0.25 MiB) + f32 h1/h2/cast intermediates (~8.5 MiB) ~= 20 MiB.
_MAX_TILE_B = 1024
_VMEM_LIMIT_BYTES = 48 * 1024 * 1024  # > usage at max tile, < v7x 64 MiB physical


def _round_up(n, m):
    return ((n + m - 1) // m) * m


def _num_tensorcores_per_chip():
    """2 TCs: v4/v5p megacore and v7x.  1 TC: v5e/v6e.  Defaults to 1 (safe)."""
    try:
        kind = jax.devices()[0].device_kind.lower()
    except Exception:
        return 1
    if "v7" in kind or "v4" in kind or "v5p" in kind:
        return 2
    return 1


def _default_tile_b(batch, n_tc):
    if n_tc >= 2 and batch > 2 * _SUBLANE:
        # Keep >= 2 "parallel" grid points so each TensorCore gets a batch shard.
        per_core = pl.cdiv(batch, n_tc)
        align = _LANE if per_core > _LANE else _SUBLANE
        return min(_round_up(per_core, align), _MAX_TILE_B)
    # Single-TC (v5e/v6e): one tile when it fits (no pointless split), else
    # large 128-multiple tiles to amortize the ~0.35 us per-step overhead.
    if batch <= _MAX_TILE_B:
        return _round_up(batch, _SUBLANE)
    return _MAX_TILE_B


def _score_kernel(x_ref, w1_ref, b1_ref, w2_ref, b2_ref, w3_ref, b3_ref, out_ref):
    # In-kernel cast of x to the MXU operand dtype (saves a wrapper pad/cast
    # pass over x in HBM).  No-op on the f32 path.
    x = x_ref[...].astype(w1_ref.dtype)
    # fc1 + ReLU: MXU matmul (K=1000, Mosaic masks the K remainder), f32
    # accumulation, f32 bias/ReLU epilogue on the VPU.
    h1 = jnp.dot(x, w1_ref[...], preferred_element_type=jnp.float32)
    h1 = jnp.maximum(h1 + b1_ref[...], 0.0)
    # fc2 + ReLU.
    h2 = jnp.dot(h1.astype(w2_ref.dtype), w2_ref[...], preferred_element_type=jnp.float32)
    h2 = jnp.maximum(h2 + b2_ref[...], 0.0)
    # fc3: lane-padded (128-wide) output slab; real outputs live in [:, :6].
    y = jnp.dot(h2.astype(w3_ref.dtype), w3_ref[...], preferred_element_type=jnp.float32)
    out_ref[...] = (y + b3_ref[...]).astype(out_ref.dtype)


def prepare_params(params, compute_dtype=jnp.bfloat16):
    """One-time pad + cast of the weights/biases (call once, NOT per forward).

    Weights are [in, out] (transpose of PyTorch's [out, in]).  W3/b3 are
    lane-padded to 128 output columns; biases stay f32 for the f32 epilogue.
    """
    w1, b1, w2, b2, w3, b3 = params
    out_pad = _round_up(OUT_DIM, _LANE)  # 6 -> 128
    w1p = jnp.asarray(w1).astype(compute_dtype)                      # (1000, 512)
    w2p = jnp.asarray(w2).astype(compute_dtype)                      # (512, 512)
    w3p = jnp.pad(jnp.asarray(w3, jnp.float32),
                  ((0, 0), (0, out_pad - OUT_DIM))).astype(compute_dtype)
    b1p = jnp.asarray(b1, jnp.float32).reshape(1, HIDDEN)
    b2p = jnp.asarray(b2, jnp.float32).reshape(1, HIDDEN)
    b3p = jnp.pad(jnp.asarray(b3, jnp.float32).reshape(1, OUT_DIM),
                  ((0, 0), (0, out_pad - OUT_DIM)))
    return (w1p, b1p, w2p, b2p, w3p, b3p)


@functools.partial(jax.jit, static_argnames=("tile_b",))
def score_forward(x, prepared, *, tile_b=None):
    """Equivalent of score.forward: relu(fc1) -> relu(fc2) -> fc3 -> view(-1, 6)."""
    w1, b1, w2, b2, w3, b3 = prepared
    orig_dtype = x.dtype
    x2d = x.reshape(-1, IN_DIM)          # nn.Linear over last dim + .view(-1, 6)
    batch = x2d.shape[0]
    out_pad = w3.shape[1]                # 128 (lane-dense output slab)
    # Store the kernel output in the compute dtype (bf16 on the default path):
    # halves the output HBM write; f32 epilogue stays in-register.
    out_dtype = w1.dtype

    n_tc = _num_tensorcores_per_chip()
    if tile_b:
        tb = min(_round_up(int(tile_b), _SUBLANE), _MAX_TILE_B)  # clamp: VMEM guard
    else:
        tb = _default_tile_b(batch, n_tc)
    grid = (pl.cdiv(batch, tb),)         # no whole-batch row pad; last tile partial
    const = lambda i: (0, 0)             # weights/biases resident in VMEM across grid

    flops = 2 * batch * (IN_DIM * HIDDEN + HIDDEN * HIDDEN + HIDDEN * out_pad)
    bytes_accessed = (
        x2d.size * x2d.dtype.itemsize
        + sum(a.size * a.dtype.itemsize for a in (w1, b1, w2, b2, w3, b3))
        + batch * out_pad * jnp.dtype(out_dtype).itemsize
    )

    out = pl.pallas_call(
        _score_kernel,
        out_shape=jax.ShapeDtypeStruct((batch, out_pad), out_dtype),
        grid_spec=pltpu.PrefetchScalarGridSpec(
            num_scalar_prefetch=0,
            grid=grid,
            in_specs=[
                pl.BlockSpec((tb, IN_DIM), lambda i: (i, 0)),   # x tile, full-K block (1000)
                pl.BlockSpec((IN_DIM, HIDDEN), const),          # W1 (1000, 512)
                pl.BlockSpec((1, HIDDEN), const),               # b1 (f32)
                pl.BlockSpec((HIDDEN, HIDDEN), const),          # W2
                pl.BlockSpec((1, HIDDEN), const),               # b2 (f32)
                pl.BlockSpec((HIDDEN, out_pad), const),         # W3 (lane-padded)
                pl.BlockSpec((1, out_pad), const),              # b3 (lane-padded, f32)
            ],
            out_specs=pl.BlockSpec((tb, out_pad), lambda i: (i, 0)),
        ),
        compiler_params=pltpu.CompilerParams(
            dimension_semantics=("parallel",),     # batch axis shards across TCs on 2-TC chips
            vmem_limit_bytes=_VMEM_LIMIT_BYTES,    # covers 1024-row tiles on v5e's 16 MiB default
        ),
        cost_estimate=pl.CostEstimate(
            flops=flops, transcendentals=0, bytes_accessed=bytes_accessed),
    )(x2d, w1, b1, w2, b2, w3, b3)

    return out[:, :OUT_DIM].astype(orig_dtype)


def init_params(key, in_dim=IN_DIM, hidden=HIDDEN, out_dim=OUT_DIM, dtype=jnp.float32):
    """Deterministic init mimicking nn.Linear's U(-1/sqrt(fan_in), 1/sqrt(fan_in)).
    Weights stored as [in, out] (transpose of PyTorch's [out, in])."""
    ks = jax.random.split(key, 6)

    def lin(kw, kb, fan_in, fan_out):
        bound = 1.0 / jnp.sqrt(fan_in)
        w = jax.random.uniform(kw, (fan_in, fan_out), dtype, -bound, bound)
        b = jax.random.uniform(kb, (1, fan_out), dtype, -bound, bound)
        return w, b

    w1, b1 = lin(ks[0], ks[1], in_dim, hidden)
    w2, b2 = lin(ks[2], ks[3], hidden, hidden)
    w3, b3 = lin(ks[4], ks[5], hidden, out_dim)
    return (w1, b1, w2, b2, w3, b3)


def _reference(x, params, compute_dtype=jnp.float32):
    """Pure-JAX reference matching the kernel's operand/output dtype handling."""
    w1, b1, w2, b2, w3, b3 = params
    x2d = x.reshape(-1, w1.shape[0])

    def lin(a, w, b):
        return jnp.dot(a.astype(compute_dtype), w.astype(compute_dtype),
                       preferred_element_type=jnp.float32) + b.reshape(1, -1)

    h1 = jax.nn.relu(lin(x2d, w1, b1))
    h2 = jax.nn.relu(lin(h1, w2, b2))
    y = lin(h2, w3, b3)
    # Kernel stores its output in the compute dtype; mirror that rounding here.
    return y.astype(compute_dtype).astype(x.dtype).reshape(-1, w3.shape[1])


if __name__ == "__main__":
    key = jax.random.PRNGKey(0)
    k_param, k_x1, k_x2 = jax.random.split(key, 3)
    params = init_params(k_param)

    # (1) Default perf path: bf16 MXU operands, f32 accumulation, bf16 store.
    prepared_bf16 = prepare_params(params, compute_dtype=jnp.bfloat16)
    x1 = jax.random.normal(k_x1, (8, 1000), dtype=jnp.float32)
    out1 = jax.block_until_ready(score_forward(x1, prepared_bf16))
    ref1 = _reference(x1, params, compute_dtype=jnp.bfloat16)
    assert out1.shape == (8, 6)
    assert jnp.allclose(out1, ref1, atol=2e-2, rtol=2e-2), float(jnp.max(jnp.abs(out1 - ref1)))

    # (2) f32 path with a 3-D input and non-multiple row count
    #     (exercises .view(-1, 6) flattening and the partial last tile).
    prepared_f32 = prepare_params(params, compute_dtype=jnp.float32)
    x2 = jax.random.normal(k_x2, (3, 5, 1000), dtype=jnp.float32)
    out2 = jax.block_until_ready(score_forward(x2, prepared_f32))
    ref2 = _reference(x2, params, compute_dtype=jnp.float32)
    assert out2.shape == (15, 6)
    assert jnp.allclose(out2, ref2, atol=1e-4, rtol=1e-4), float(jnp.max(jnp.abs(out2 - ref2)))

    print("KERNEL_OK")
</pallas_src>

<mosaic_0001>
module attributes {stable_mosaic.version = 11 : i64} {
  func.func @_score_kernel(%arg0: i32, %arg1: memref<8x1000xf32, #tpu.memory_space<vmem>>, %arg2: memref<1000x512xbf16, #tpu.memory_space<vmem>>, %arg3: memref<1x512xf32, #tpu.memory_space<vmem>>, %arg4: memref<512x512xbf16, #tpu.memory_space<vmem>>, %arg5: memref<1x512xf32, #tpu.memory_space<vmem>>, %arg6: memref<512x128xbf16, #tpu.memory_space<vmem>>, %arg7: memref<1x128xf32, #tpu.memory_space<vmem>>, %arg8: memref<8x128xbf16, #tpu.memory_space<vmem>>) attributes {dimension_semantics = [#tpu.dimension_semantics<parallel>], iteration_bounds = array<i64: 1>, scalar_prefetch = 0 : i64, scratch_operands = 0 : i64, tpu.core_type = #tpu.core_type<tc>, window_params = [{transform_indices = @transform_0, window_bounds = array<i64: 8, 1000>}, {pipeline_mode = #tpu.pipeline_mode<synchronous>, transform_indices = @transform_1, window_bounds = array<i64: 1000, 512>}, {pipeline_mode = #tpu.pipeline_mode<synchronous>, transform_indices = @transform_2, window_bounds = array<i64: 1, 512>}, {pipeline_mode = #tpu.pipeline_mode<synchronous>, transform_indices = @transform_3, window_bounds = array<i64: 512, 512>}, {pipeline_mode = #tpu.pipeline_mode<synchronous>, transform_indices = @transform_4, window_bounds = array<i64: 1, 512>}, {pipeline_mode = #tpu.pipeline_mode<synchronous>, transform_indices = @transform_5, window_bounds = array<i64: 512, 128>}, {pipeline_mode = #tpu.pipeline_mode<synchronous>, transform_indices = @transform_6, window_bounds = array<i64: 1, 128>}, {transform_indices = @transform_7, window_bounds = array<i64: 8, 128>}]} {
    %c0 = arith.constant 0 : index
    %c0_0 = arith.constant 0 : index
    %0 = vector.load %arg1[%c0, %c0_0] : memref<8x1000xf32, #tpu.memory_space<vmem>>, vector<8x1000xf32>
    %1 = arith.truncf %0 : vector<8x1000xf32> to vector<8x1000xbf16>
    %c0_1 = arith.constant 0 : index
    %c0_2 = arith.constant 0 : index
    %2 = vector.load %arg2[%c0_1, %c0_2] : memref<1000x512xbf16, #tpu.memory_space<vmem>>, vector<1000x512xbf16>
    %cst = arith.constant dense<0.000000e+00> : vector<8x512xf32>
    %3 = tpu.matmul %1, %2, %cst {dimension_numbers = #tpu.dot_dimension_numbers<[1], [0], [0], [1], [0, 0, 1, 1], [], []>} : vector<8x1000xbf16>, vector<1000x512xbf16>, vector<8x512xf32> -> vector<8x512xf32>
    %c0_3 = arith.constant 0 : index
    %c0_4 = arith.constant 0 : index
    %4 = vector.load %arg3[%c0_3, %c0_4] : memref<1x512xf32, #tpu.memory_space<vmem>>, vector<1x512xf32>
    %5 = vector.broadcast %4 : vector<1x512xf32> to vector<8x512xf32>
    %6 = arith.addf %3, %5 : vector<8x512xf32>
    %cst_5 = arith.constant 0.000000e+00 : f32
    %7 = vector.broadcast %cst_5 : f32 to vector<8x512xf32>
    %8 = arith.maximumf %6, %7 : vector<8x512xf32>
    %9 = arith.truncf %8 : vector<8x512xf32> to vector<8x512xbf16>
    %c0_6 = arith.constant 0 : index
    %c0_7 = arith.constant 0 : index
    %10 = vector.load %arg4[%c0_6, %c0_7] : memref<512x512xbf16, #tpu.memory_space<vmem>>, vector<512x512xbf16>
    %cst_8 = arith.constant dense<0.000000e+00> : vector<8x512xf32>
    %11 = tpu.matmul %9, %10, %cst_8 {dimension_numbers = #tpu.dot_dimension_numbers<[1], [0], [0], [1], [0, 0, 1, 1], [], []>} : vector<8x512xbf16>, vector<512x512xbf16>, vector<8x512xf32> -> vector<8x512xf32>
    %c0_9 = arith.constant 0 : index
    %c0_10 = arith.constant 0 : index
    %12 = vector.load %arg5[%c0_9, %c0_10] : memref<1x512xf32, #tpu.memory_space<vmem>>, vector<1x512xf32>
    %13 = vector.broadcast %12 : vector<1x512xf32> to vector<8x512xf32>
    %14 = arith.addf %11, %13 : vector<8x512xf32>
    %cst_11 = arith.constant 0.000000e+00 : f32
    %15 = vector.broadcast %cst_11 : f32 to vector<8x512xf32>
    %16 = arith.maximumf %14, %15 : vector<8x512xf32>
    %17 = arith.truncf %16 : vector<8x512xf32> to vector<8x512xbf16>
    %c0_12 = arith.constant 0 : index
    %c0_13 = arith.constant 0 : index
    %18 = vector.load %arg6[%c0_12, %c0_13] : memref<512x128xbf16, #tpu.memory_space<vmem>>, vector<512x128xbf16>
    %cst_14 = arith.constant dense<0.000000e+00> : vector<8x128xf32>
    %19 = tpu.matmul %17, %18, %cst_14 {dimension_numbers = #tpu.dot_dimension_numbers<[1], [0], [0], [1], [0, 0, 1, 1], [], []>} : vector<8x512xbf16>, vector<512x128xbf16>, vector<8x128xf32> -> vector<8x128xf32>
    %c0_15 = arith.constant 0 : index
    %c0_16 = arith.constant 0 : index
    %20 = vector.load %arg7[%c0_15, %c0_16] : memref<1x128xf32, #tpu.memory_space<vmem>>, vector<1x128xf32>
    %21 = vector.broadcast %20 : vector<1x128xf32> to vector<8x128xf32>
    %22 = arith.addf %19, %21 : vector<8x128xf32>
    %23 = arith.truncf %22 : vector<8x128xf32> to vector<8x128xbf16>
    %c0_17 = arith.constant 0 : index
    %c0_18 = arith.constant 0 : index
    %24 = vector.load %arg8[%c0_17, %c0_18] : memref<8x128xbf16, #tpu.memory_space<vmem>>, vector<8x128xbf16>
    tpu.vector_store %arg8[%c0_17, %c0_18], %23 {strides = array<i32>} : memref<8x128xbf16, #tpu.memory_space<vmem>>, vector<8x128xbf16>,
    return
  }
  func.func @transform_0(%arg0: i32) -> (i32, i32) {
    %c0_i32 = arith.constant 0 : i32
    %c0_i32_0 = arith.constant 0 : i32
    return %arg0, %c0_i32 : i32, i32
  }
  func.func @transform_1(%arg0: i32) -> (i32, i32) {
    %c0_i32 = arith.constant 0 : i32
    %c0_i32_0 = arith.constant 0 : i32
    %c0_i32_1 = arith.constant 0 : i32
    return %c0_i32, %c0_i32_0 : i32, i32
  }
  func.func @transform_2(%arg0: i32) -> (i32, i32) {
    %c0_i32 = arith.constant 0 : i32
    %c0_i32_0 = arith.constant 0 : i32
    %c0_i32_1 = arith.constant 0 : i32
    return %c0_i32, %c0_i32_0 : i32, i32
  }
  func.func @transform_3(%arg0: i32) -> (i32, i32) {
    %c0_i32 = arith.constant 0 : i32
    %c0_i32_0 = arith.constant 0 : i32
    %c0_i32_1 = arith.constant 0 : i32
    return %c0_i32, %c0_i32_0 : i32, i32
  }
  func.func @transform_4(%arg0: i32) -> (i32, i32) {
    %c0_i32 = arith.constant 0 : i32
    %c0_i32_0 = arith.constant 0 : i32
    %c0_i32_1 = arith.constant 0 : i32
    return %c0_i32, %c0_i32_0 : i32, i32
  }
  func.func @transform_5(%arg0: i32) -> (i32, i32) {
    %c0_i32 = arith.constant 0 : i32
    %c0_i32_0 = arith.constant 0 : i32
    %c0_i32_1 = arith.constant 0 : i32
    return %c0_i32, %c0_i32_0 : i32, i32
  }
  func.func @transform_6(%arg0: i32) -> (i32, i32) {
    %c0_i32 = arith.constant 0 : i32
    %c0_i32_0 = arith.constant 0 : i32
    %c0_i32_1 = arith.constant 0 : i32
    return %c0_i32, %c0_i32_0 : i32, i32
  }
  func.func @transform_7(%arg0: i32) -> (i32, i32) {
    %c0_i32 = arith.constant 0 : i32
    %c0_i32_0 = arith.constant 0 : i32
    return %arg0, %c0_i32 : i32, i32
  }
}

</mosaic_0001>

<llo_original>
// kernel: score_forward.1
$region0: #{score_forward.1}
  #allocation0 [shape = 'u32[]', space=smem, size = 0x4, offset = 0x4, fixed_abs, tag = 'smem constant byte address 0x4 - core index']
  #allocation1 [shape = 'u32[144,128]{1,0:T(1,128)}', space=vmem, size = 0x12000, scoped, tag = 'internal scratch']
  %s0 = inlined_call_operand.hbm [shape: f32[8,1000], index: 0, kind: input, shape index: {}]
  %s1 = inlined_call_operand.hbm [shape: bf16[1000,512], index: 1, kind: input, shape index: {}]
  %s2 = inlined_call_operand.vmem [shape: f32[1,512], index: 2, kind: input, shape index: {}]
  %s3 = inlined_call_operand.hbm [shape: bf16[512,512], index: 3, kind: input, shape index: {}]
  %s4 = inlined_call_operand.vmem [shape: f32[1,512], index: 4, kind: input, shape index: {}]
  %s5 = inlined_call_operand.hbm [shape: bf16[512,128], index: 5, kind: input, shape index: {}]
  %s6 = inlined_call_operand.vmem [shape: f32[1,128], index: 6, kind: input, shape index: {}]
  %s7 = inlined_call_operand.vmem [shape: bf16[8,128], index: 7, kind: output, shape index: {}]
  %s8 = sld [smem:[#allocation0]]
  $region54: #{score_forward.1} parent=0
    _
  %s10 = ssub.s32 1, %s8
  %s11 = scalar_select 0, %s10, %s8
  $region1: #{score_forward.1} parent=0
    #allocation2 [shape = 'u8[32768]{0}', space=vmem, size = 0x8000, scoped, tag = 'input window, operand 0, single buffered']
    #allocation3 [shape = 's32[1]{0}', space=sflag, size = 0x4, scoped, tag = 'scoped memory for score_forward.1']
    #allocation4 [shape = 'u8[1024000]{0}', space=vmem, size = 0xfa000, scoped, tag = 'input window, operand 1, single buffered']
    #allocation5 [shape = 's32[1]{0}', space=sflag, size = 0x4, scoped, tag = 'scoped memory for score_forward.1']
    #allocation6 [shape = 'u8[524288]{0}', space=vmem, size = 0x80000, scoped, tag = 'input window, operand 3, single buffered']
    #allocation7 [shape = 'u8[131072]{0}', space=vmem, size = 0x20000, scoped, tag = 'input window, operand 5, single buffered']
    #allocation8 [shape = 's32[1]{0}', space=sflag, size = 0x4, scoped, tag = 'scoped memory for score_forward.1']
    %12 = vsyncpa [#allocation3], 0
    %13 = vsyncpa [#allocation5], 0
    %14 = vsyncpa [#allocation8], 0
    // Predicated region
    $region2: #{score_forward.1} parent=1 // pred_check
      _
    $region3: #{score_forward.1} parent=1 // pred_check_branch
      %16 = sbr.rel (0) target = $region5
    $region4: #{score_forward.1} parent=1 // pred_region
      %s18 = ssub.s32 1024, 1024
      %19 = vsyncadd [#allocation3], %s18
      %s21 = sshll.u32 [#allocation2], 4
      %s22 = int_to_ptr.vmem [resolvable:$true] %s21
      %24 = dma.hbm_to_vmem [thread:$0]  %s0, 1024, %s22, [#allocation3]
    $region5: #{score_forward.1} parent=1 // pred_fallthru
      _
    // Predicated region
    $region6: #{score_forward.1} parent=1 // pred_check
      _
    $region7: #{score_forward.1} parent=1 // pred_check_branch
      %26 = sbr.rel (0) target = $region9
    $region8: #{score_forward.1} parent=1 // pred_region
      %s28 = ssub.s32 32000, 32000
      %29 = vsyncadd [#allocation5], %s28
      %s30 = sshll.u32 [#allocation4], 4
      %s31 = int_to_ptr.vmem [resolvable:$true] %s30
      %36 = dma.hbm_to_vmem [thread:$0]  %s1, 32000, %s31, [#allocation5], 256, 256, 16
    $region9: #{score_forward.1} parent=1 // pred_fallthru
      _
    // Predicated region
    $region10: #{score_forward.1} parent=1 // pred_check
      _
    $region11: #{score_forward.1} parent=1 // pred_check_branch
      %38 = sbr.rel (0) target = $region13
    $region12: #{score_forward.1} parent=1 // pred_region
      _
    $region13: #{score_forward.1} parent=1 // pred_fallthru
      _
    // Predicated region
    $region14: #{score_forward.1} parent=1 // pred_check
      _
    $region15: #{score_forward.1} parent=1 // pred_check_branch
      %40 = sbr.rel (0) target = $region17
    $region16: #{score_forward.1} parent=1 // pred_region
      %s42 = ssub.s32 16384, 16384
      %43 = vsyncadd [#allocation5], %s42
      %s44 = sshll.u32 [#allocation6], 4
      %s45 = int_to_ptr.vmem [resolvable:$true] %s44
      %50 = dma.hbm_to_vmem [thread:$0]  %s3, 16384, %s45, [#allocation5], 256, 256, 16
    $region17: #{score_forward.1} parent=1 // pred_fallthru
      _
    // Predicated region
    $region18: #{score_forward.1} parent=1 // pred_check
      _
    $region19: #{score_forward.1} parent=1 // pred_check_branch
      %52 = sbr.rel (0) target = $region21
    $region20: #{score_forward.1} parent=1 // pred_region
      _
    $region21: #{score_forward.1} parent=1 // pred_fallthru
      _
    // Predicated region
    $region22: #{score_forward.1} parent=1 // pred_check
      _
    $region23: #{score_forward.1} parent=1 // pred_check_branch
      %54 = sbr.rel (0) target = $region25
    $region24: #{score_forward.1} parent=1 // pred_region
      %s56 = ssub.s32 4096, 4096
      %57 = vsyncadd [#allocation8], %s56
      %s58 = sshll.u32 [#allocation7], 4
      %s59 = int_to_ptr.vmem [resolvable:$true] %s58
      %64 = dma.hbm_to_vmem [thread:$0]  %s5, 4096, %s59, [#allocation8], 64, 64, 4
    $region25: #{score_forward.1} parent=1 // pred_fallthru
      _
    // Predicated region
    $region26: #{score_forward.1} parent=1 // pred_check
      _
    $region27: #{score_forward.1} parent=1 // pred_check_branch
      %66 = sbr.rel (0) target = $region29
    $region28: #{score_forward.1} parent=1 // pred_region
      _
    $region29: #{score_forward.1} parent=1 // pred_fallthru
      _
    // Predicated region
    $region30: #{score_forward.1} parent=1 // pred_check
      _
    $region31: #{score_forward.1} parent=1 // pred_check_branch
      %68 = sbr.rel (0) target = $region33
    $region32: #{score_forward.1} parent=1 // pred_region
      %69 = dma.done [#allocation3], 1024
    $region33: #{score_forward.1} parent=1 // pred_fallthru
      _
    // Predicated region
    $region34: #{score_forward.1} parent=1 // pred_check
      _
    $region35: #{score_forward.1} parent=1 // pred_check_branch
      %71 = sbr.rel (0) target = $region37
    $region36: #{score_forward.1} parent=1 // pred_region
      %72 = dma.done [#allocation5], 32000
    $region37: #{score_forward.1} parent=1 // pred_fallthru
      _
    // Predicated region
    $region38: #{score_forward.1} parent=1 // pred_check
      _
    $region39: #{score_forward.1} parent=1 // pred_check_branch
      %74 = sbr.rel (0) target = $region41
    $region40: #{score_forward.1} parent=1 // pred_region
      %75 = dma.done [#allocation5], 16384
    $region41: #{score_forward.1} parent=1 // pred_fallthru
      _
    // Predicated region
    $region42: #{score_forward.1} parent=1 // pred_check
      _
    $region43: #{score_forward.1} parent=1 // pred_check_branch
      %77 = sbr.rel (0) target = $region45
    $region44: #{score_forward.1} parent=1 // pred_region
      %78 = dma.done [#allocation8], 4096
    $region45: #{score_forward.1} parent=1 // pred_fallthru
      _
    %v80 = vld [vmem:[#allocation2] sm:$0xff]
    %v81 = vld [vmem:[#allocation2 + $0x8] sm:$0xff]
    %v82 = vld [vmem:[#allocation2 + $0x10] sm:$0xff]
    %v83 = vld [vmem:[#allocation2 + $0x18] sm:$0xff]
    %v84 = vld [vmem:[#allocation2 + $0x20] sm:$0xff]
    %v85 = vld [vmem:[#allocation2 + $0x28] sm:$0xff]
    %v86 = vld [vmem:[#allocation2 + $0x30] sm:$0xff]
    %v87 = vld [vmem:[#allocation2 + $0x38] sm:$0xff]
    %v88 = vpack.c.bf16 %v80, %v80
    %v89 = vpack.c.bf16 %v81, %v81
    %v90 = vpack.c.bf16 %v82, %v82
    %v91 = vpack.c.bf16 %v83, %v83
    %v92 = vpack.c.bf16 %v84, %v84
    %v93 = vpack.c.bf16 %v85, %v85
    %v94 = vpack.c.bf16 %v86, %v86
    %v95 = vpack.c.bf16 %v87, %v87
    %v96 = vld [vmem:[#allocation4] sm:$0xff]
    %v97 = vld [vmem:[#allocation4 + $0x8] sm:$0xff]
    %v98 = vld [vmem:[#allocation4 + $0x10] sm:$0xff]
    %v99 = vld [vmem:[#allocation4 + $0x18] sm:$0xff]
    %v100 = vld [vmem:[#allocation4 + $0x20] sm:$0xff]
    %v101 = vld [vmem:[#allocation4 + $0x28] sm:$0xff]
    %v102 = vld [vmem:[#allocation4 + $0x30] sm:$0xff]
    %v103 = vld [vmem:[#allocation4 + $0x38] sm:$0xff]
    %v104 = vld [vmem:[#allocation4 + $0x40] sm:$0xff]
    %v105 = vld [vmem:[#allocation4 + $0x48] sm:$0xff]
    %v106 = vld [vmem:[#allocation4 + $0x50] sm:$0xff]
    %v107 = vld [vmem:[#allocation4 + $0x58] sm:$0xff]
    %v108 = vld [vmem:[#allocation4 + $0x60] sm:$0xff]
    %v109 = vld [vmem:[#allocation4 + $0x68] sm:$0xff]
    %v110 = vld [vmem:[#allocation4 + $0x70] sm:$0xff]
    %v111 = vld [vmem:[#allocation4 + $0x78] sm:$0xff]
    %v112 = vld [vmem:[#allocation4 + $0x80] sm:$0xff]
    %v113 = vld [vmem:[#allocation4 + $0x88] sm:$0xff]
    %v114 = vld [vmem:[#allocation4 + $0x90] sm:$0xff]
    %v115 = vld [vmem:[#allocation4 + $0x98] sm:$0xff]
    %v116 = vld [vmem:[#allocation4 + $0xa0] sm:$0xff]
    %v117 = vld [vmem:[#allocation4 + $0xa8] sm:$0xff]
    %v118 = vld [vmem:[#allocation4 + $0xb0] sm:$0xff]
    %v119 = vld [vmem:[#allocation4 + $0xb8] sm:$0xff]
    %v120 = vld [vmem:[#allocation4 + $0xc0] sm:$0xff]
    %v121 = vld [vmem:[#allocation4 + $0xc8] sm:$0xff]
    %v122 = vld [vmem:[#allocation4 + $0xd0] sm:$0xff]
    %v123 = vld [vmem:[#allocation4 + $0xd8] sm:$0xff]
    %v124 = vld [vmem:[#allocation4 + $0xe0] sm:$0xff]
    %v125 = vld [vmem:[#allocation4 + $0xe8] sm:$0xff]
    %v126 = vld [vmem:[#allocation4 + $0xf0] sm:$0xff]
    %v127 = vld [vmem:[#allocation4 + $0xf8] sm:$0xff]
    %v128 = vld [vmem:[#allocation4 + $0x100] sm:$0xff]
    %v129 = vld [vmem:[#allocation4 + $0x108] sm:$0xff]
    %v130 = vld [vmem:[#allocation4 + $0x110] sm:$0xff]
    %v131 = vld [vmem:[#allocation4 + $0x118] sm:$0xff]
    %v132 = vld [vmem:[#allocation4 + $0x120] sm:$0xff]
    %v133 = vld [vmem:[#allocation4 + $0x128] sm:$0xff]
    %v134 = vld [vmem:[#allocation4 + $0x130] sm:$0xff]
    %v135 = vld [vmem:[#allocation4 + $0x138] sm:$0xff]
    %v136 = vld [vmem:[#allocation4 + $0x140] sm:$0xff]
    %v137 = vld [vmem:[#allocation4 + $0x148] sm:$0xff]
    %v138 = vld [vmem:[#allocation4 + $0x150] sm:$0xff]
    %v139 = vld [vmem:[#allocation4 + $0x158] sm:$0xff]
    %v140 = vld [vmem:[#allocation4 + $0x160] sm:$0xff]
    %v141 = vld [vmem:[#allocation4 + $0x168] sm:$0xff]
    %v142 = vld [vmem:[#allocation4 + $0x170] sm:$0xff]
    %v143 = vld [vmem:[#allocation4 + $0x178] sm:$0xff]
    %v144 = vld [vmem:[#allocation4 + $0x180] sm:$0xff]
    %v145 = vld [vmem:[#allocation4 + $0x188] sm:$0xff]
    %v146 = vld [vmem:[#allocation4 + $0x190] sm:$0xff]
    %v147 = vld [vmem:[#allocation4 + $0x198] sm:$0xff]
    %v148 = vld [vmem:[#allocation4 + $0x1a0] sm:$0xff]
    %v149 = vld [vmem:[#allocation4 + $0x1a8] sm:$0xff]
    %v150 = vld [vmem:[#allocation4 + $0x1b0] sm:$0xff]
    %v151 = vld [vmem:[#allocation4 + $0x1b8] sm:$0xff]
    %v152 = vld [vmem:[#allocation4 + $0x1c0] sm:$0xff]
    %v153 = vld [vmem:[#allocation4 + $0x1c8] sm:$0xff]
    %v154 = vld [vmem:[#allocation4 + $0x1d0] sm:$0xff]
    %v155 = vld [vmem:[#allocation4 + $0x1d8] sm:$0xff]
    %v156 = vld [vmem:[#allocation4 + $0x1e0] sm:$0xff]
    %v157 = vld [vmem:[#allocation4 + $0x1e8] sm:$0xff]
    %v158 = vld [vmem:[#allocation4 + $0x1f0] sm:$0xff]
    %v159 = vld [vmem:[#allocation4 + $0x1f8] sm:$0xff]
    %v160 = vld [vmem:[#allocation4 + $0x200] sm:$0xff]
    %v161 = vld [vmem:[#allocation4 + $0x208] sm:$0xff]
    %v162 = vld [vmem:[#allocation4 + $0x210] sm:$0xff]
    %v163 = vld [vmem:[#allocation4 + $0x218] sm:$0xff]
    %v164 = vld [vmem:[#allocation4 + $0x220] sm:$0xff]
    %v165 = vld [vmem:[#allocation4 + $0x228] sm:$0xff]
    %v166 = vld [vmem:[#allocation4 + $0x230] sm:$0xff]
    %v167 = vld [vmem:[#allocation4 + $0x238] sm:$0xff]
    %v168 = vld [vmem:[#allocation4 + $0x240] sm:$0xff]
    %v169 = vld [vmem:[#allocation4 + $0x248] sm:$0xff]
    %v170 = vld [vmem:[#allocation4 + $0x250] sm:$0xff]
    %v171 = vld [vmem:[#allocation4 + $0x258] sm:$0xff]
    %v172 = vld [vmem:[#allocation4 + $0x260] sm:$0xff]
    %v173 = vld [vmem:[#allocation4 + $0x268] sm:$0xff]
    %v174 = vld [vmem:[#allocation4 + $0x270] sm:$0xff]
    %v175 = vld [vmem:[#allocation4 + $0x278] sm:$0xff]
    %v176 = vld [vmem:[#allocation4 + $0x280] sm:$0xff]
    %v177 = vld [vmem:[#allocation4 + $0x288] sm:$0xff]
    %v178 = vld [vmem:[#allocation4 + $0x290] sm:$0xff]
    %v179 = vld [vmem:[#allocation4 + $0x298] sm:$0xff]
    %v180 = vld [vmem:[#allocation4 + $0x2a0] sm:$0xff]
    %v181 = vld [vmem:[#allocation4 + $0x2a8] sm:$0xff]
    %v182 = vld [vmem:[#allocation4 + $0x2b0] sm:$0xff]
    %v183 = vld [vmem:[#allocation4 + $0x2b8] sm:$0xff]
    %v184 = vld [vmem:[#allocation4 + $0x2c0] sm:$0xff]
    %v185 = vld [vmem:[#allocation4 + $0x2c8] sm:$0xff]
    %v186 = vld [vmem:[#allocation4 + $0x2d0] sm:$0xff]
    %v187 = vld [vmem:[#allocation4 + $0x2d8] sm:$0xff]
    %v188 = vld [vmem:[#allocation4 + $0x2e0] sm:$0xff]
    %v189 = vld [vmem:[#allocation4 + $0x2e8] sm:$0xff]
    %v190 = vld [vmem:[#allocation4 + $0x2f0] sm:$0xff]
    %v191 = vld [vmem:[#allocation4 + $0x2f8] sm:$0xff]
    %v192 = vld [vmem:[#allocation4 + $0x300] sm:$0xff]
    %v193 = vld [vmem:[#allocation4 + $0x308] sm:$0xff]
    %v194 = vld [vmem:[#allocation4 + $0x310] sm:$0xff]
    %v195 = vld [vmem:[#allocation4 + $0x318] sm:$0xff]
    %v196 = vld [vmem:[#allocation4 + $0x320] sm:$0xff]
    %v197 = vld [vmem:[#allocation4 + $0x328] sm:$0xff]
    %v198 = vld [vmem:[#allocation4 + $0x330] sm:$0xff]
    %v199 = vld [vmem:[#allocation4 + $0x338] sm:$0xff]
    %v200 = vld [vmem:[#allocation4 + $0x340] sm:$0xff]
    %v201 = vld [vmem:[#allocation4 + $0x348] sm:$0xff]
    %v202 = vld [vmem:[#allocation4 + $0x350] sm:$0xff]
    %v203 = vld [vmem:[#allocation4 + $0x358] sm:$0xff]
    %v204 = vld [vmem:[#allocation4 + $0x360] sm:$0xff]
    %v205 = vld [vmem:[#allocation4 + $0x368] sm:$0xff]
    %v206 = vld [vmem:[#allocation4 + $0x370] sm:$0xff]
    %v207 = vld [vmem:[#allocation4 + $0x378] sm:$0xff]
    %v208 = vld [vmem:[#allocation4 + $0x380] sm:$0xff]
    %v209 = vld [vmem:[#allocation4 + $0x388] sm:$0xff]
    %v210 = vld [vmem:[#allocation4 + $0x390] sm:$0xff]
    %v211 = vld [vmem:[#allocation4 + $0x398] sm:$0xff]
    %v212 = vld [vmem:[#allocation4 + $0x3a0] sm:$0xff]
    %v213 = vld [vmem:[#allocation4 + $0x3a8] sm:$0xff]
    %v214 = vld [vmem:[#allocation4 + $0x3b0] sm:$0xff]
    %v215 = vld [vmem:[#allocation4 + $0x3b8] sm:$0xff]
    %v216 = vld [vmem:[#allocation4 + $0x3c0] sm:$0xff]
    %v217 = vld [vmem:[#allocation4 + $0x3c8] sm:$0xff]
    %v218 = vld [vmem:[#allocation4 + $0x3d0] sm:$0xff]
    %v219 = vld [vmem:[#allocation4 + $0x3d8] sm:$0xff]
    %v220 = vld [vmem:[#allocation4 + $0x3e0] sm:$0xff]
    %v221 = vld [vmem:[#allocation4 + $0x3e8] sm:$0xff]
    %v222 = vld [vmem:[#allocation4 + $0x3f0] sm:$0xff]
    %v223 = vld [vmem:[#allocation4 + $0x3f8] sm:$0xff]
    %v224 = vld [vmem:[#allocation4 + $0x400] sm:$0xff]
    %v225 = vld [vmem:[#allocation4 + $0x408] sm:$0xff]
    %v226 = vld [vmem:[#allocation4 + $0x410] sm:$0xff]
    %v227 = vld [vmem:[#allocation4 + $0x418] sm:$0xff]
    %v228 = vld [vmem:[#allocation4 + $0x420] sm:$0xff]
    %v229 = vld [vmem:[#allocation4 + $0x428] sm:$0xff]
    %v230 = vld [vmem:[#allocation4 + $0x430] sm:$0xff]
    %v231 = vld [vmem:[#allocation4 + $0x438] sm:$0xff]
    %v232 = vld [vmem:[#allocation4 + $0x440] sm:$0xff]
    %v233 = vld [vmem:[#allocation4 + $0x448] sm:$0xff]
    %v234 = vld [vmem:[#allocation4 + $0x450] sm:$0xff]
    %v235 = vld [vmem:[#allocation4 + $0x458] sm:$0xff]
    %v236 = vld [vmem:[#allocation4 + $0x460] sm:$0xff]
    %v237 = vld [vmem:[#allocation4 + $0x468] sm:$0xff]
    %v238 = vld [vmem:[#allocation4 + $0x470] sm:$0xff]
    %v239 = vld [vmem:[#allocation4 + $0x478] sm:$0xff]
    %v240 = vld [vmem:[#allocation4 + $0x480] sm:$0xff]
    %v241 = vld [vmem:[#allocation4 + $0x488] sm:$0xff]
    %v242 = vld [vmem:[#allocation4 + $0x490] sm:$0xff]
    %v243 = vld [vmem:[#allocation4 + $0x498] sm:$0xff]
    %v244 = vld [vmem:[#allocation4 + $0x4a0] sm:$0xff]
    %v245 = vld [vmem:[#allocation4 + $0x4a8] sm:$0xff]
    %v246 = vld [vmem:[#allocation4 + $0x4b0] sm:$0xff]
    %v247 = vld [vmem:[#allocation4 + $0x4b8] sm:$0xff]
    %v248 = vld [vmem:[#allocation4 + $0x4c0] sm:$0xff]
    %v249 = vld [vmem:[#allocation4 + $0x4c8] sm:$0xff]
    %v250 = vld [vmem:[#allocation4 + $0x4d0] sm:$0xff]
    %v251 = vld [vmem:[#allocation4 + $0x4d8] sm:$0xff]
    %v252 = vld [vmem:[#allocation4 + $0x4e0] sm:$0xff]
    %v253 = vld [vmem:[#allocation4 + $0x4e8] sm:$0xff]
    %v254 = vld [vmem:[#allocation4 + $0x4f0] sm:$0xff]
    %v255 = vld [vmem:[#allocation4 + $0x4f8] sm:$0xff]
    %v256 = vld [vmem:[#allocation4 + $0x500] sm:$0xff]
    %v257 = vld [vmem:[#allocation4 + $0x508] sm:$0xff]
    %v258 = vld [vmem:[#allocation4 + $0x510] sm:$0xff]
    %v259 = vld [vmem:[#allocation4 + $0x518] sm:$0xff]
    %v260 = vld [vmem:[#allocation4 + $0x520] sm:$0xff]
    %v261 = vld [vmem:[#allocation4 + $0x528] sm:$0xff]
    %v262 = vld [vmem:[#allocation4 + $0x530] sm:$0xff]
    %v263 = vld [vmem:[#allocation4 + $0x538] sm:$0xff]
    %v264 = vld [vmem:[#allocation4 + $0x540] sm:$0xff]
    %v265 = vld [vmem:[#allocation4 + $0x548] sm:$0xff]
    %v266 = vld [vmem:[#allocation4 + $0x550] sm:$0xff]
    %v267 = vld [vmem:[#allocation4 + $0x558] sm:$0xff]
    %v268 = vld [vmem:[#allocation4 + $0x560] sm:$0xff]
    %v269 = vld [vmem:[#allocation4 + $0x568] sm:$0xff]
    %v270 = vld [vmem:[#allocation4 + $0x570] sm:$0xff]
    %v271 = vld [vmem:[#allocation4 + $0x578] sm:$0xff]
    %v272 = vld [vmem:[#allocation4 + $0x580] sm:$0xff]
    %v273 = vld [vmem:[#allocation4 + $0x588] sm:$0xff]
    %v274 = vld [vmem:[#allocation4 + $0x590] sm:$0xff]
    %v275 = vld [vmem:[#allocation4 + $0x598] sm:$0xff]
    %v276 = vld [vmem:[#allocation4 + $0x5a0] sm:$0xff]
    %v277 = vld [vmem:[#allocation4 + $0x5a8] sm:$0xff]
    %v278 = vld [vmem:[#allocation4 + $0x5b0] sm:$0xff]
    %v279 = vld [vmem:[#allocation4 + $0x5b8] sm:$0xff]
    %v280 = vld [vmem:[#allocation4 + $0x5c0] sm:$0xff]
    %v281 = vld [vmem:[#allocation4 + $0x5c8] sm:$0xff]
    %v282 = vld [vmem:[#allocation4 + $0x5d0] sm:$0xff]
    %v283 = vld [vmem:[#allocation4 + $0x5d8] sm:$0xff]
    %v284 = vld [vmem:[#allocation4 + $0x5e0] sm:$0xff]
    %v285 = vld [vmem:[#allocation4 + $0x5e8] sm:$0xff]
    %v286 = vld [vmem:[#allocation4 + $0x5f0] sm:$0xff]
    %v287 = vld [vmem:[#allocation4 + $0x5f8] sm:$0xff]
    %v288 = vld [vmem:[#allocation4 + $0x600] sm:$0xff]
    %v289 = vld [vmem:[#allocation4 + $0x608] sm:$0xff]
    %v290 = vld [vmem:[#allocation4 + $0x610] sm:$0xff]
    %v291 = vld [vmem:[#allocation4 + $0x618] sm:$0xff]
    %v292 = vld [vmem:[#allocation4 + $0x620] sm:$0xff]
    %v293 = vld [vmem:[#allocation4 + $0x628] sm:$0xff]
    %v294 = vld [vmem:[#allocation4 + $0x630] sm:$0xff]
    %v295 = vld [vmem:[#allocation4 + $0x638] sm:$0xff]
    %v296 = vld [vmem:[#allocation4 + $0x640] sm:$0xff]
    %v297 = vld [vmem:[#allocation4 + $0x648] sm:$0xff]
    %v298 = vld [vmem:[#allocation4 + $0x650] sm:$0xff]
    %v299 = vld [vmem:[#allocation4 + $0x658] sm:$0xff]
    %v300 = vld [vmem:[#allocation4 + $0x660] sm:$0xff]
    %v301 = vld [vmem:[#allocation4 + $0x668] sm:$0xff]
    %v302 = vld [vmem:[#allocation4 + $0x670] sm:$0xff]
    %v303 = vld [vmem:[#allocation4 + $0x678] sm:$0xff]
    %v304 = vld [vmem:[#allocation4 + $0x680] sm:$0xff]
    %v305 = vld [vmem:[#allocation4 + $0x688] sm:$0xff]
    %v306 = vld [vmem:[#allocation4 + $0x690] sm:$0xff]
    %v307 = vld [vmem:[#allocation4 + $0x698] sm:$0xff]
    %v308 = vld [vmem:[#allocation4 + $0x6a0] sm:$0xff]
    %v309 = vld [vmem:[#allocation4 + $0x6a8] sm:$0xff]
    %v310 = vld [vmem:[#allocation4 + $0x6b0] sm:$0xff]
    %v311 = vld [vmem:[#allocation4 + $0x6b8] sm:$0xff]
    %v312 = vld [vmem:[#allocation4 + $0x6c0] sm:$0xff]
    %v313 = vld [vmem:[#allocation4 + $0x6c8] sm:$0xff]
    %v314 = vld [vmem:[#allocation4 + $0x6d0] sm:$0xff]
    %v315 = vld [vmem:[#allocation4 + $0x6d8] sm:$0xff]
    %v316 = vld [vmem:[#allocation4 + $0x6e0] sm:$0xff]
    %v317 = vld [vmem:[#allocation4 + $0x6e8] sm:$0xff]
    %v318 = vld [vmem:[#allocation4 + $0x6f0] sm:$0xff]
    %v319 = vld [vmem:[#allocation4 + $0x6f8] sm:$0xff]
    %v320 = vld [vmem:[#allocation4 + $0x700] sm:$0xff]
    %v321 = vld [vmem:[#allocation4 + $0x708] sm:$0xff]
    %v322 = vld [vmem:[#allocation4 + $0x710] sm:$0xff]
    %v323 = vld [vmem:[#allocation4 + $0x718] sm:$0xff]
    %v324 = vld [vmem:[#allocation4 + $0x720] sm:$0xff]
    %v325 = vld [vmem:[#allocation4 + $0x728] sm:$0xff]
    %v326 = vld [vmem:[#allocation4 + $0x730] sm:$0xff]
    %v327 = vld [vmem:[#allocation4 + $0x738] sm:$0xff]
    %v328 = vld [vmem:[#allocation4 + $0x740] sm:$0xff]
    %v329 = vld [vmem:[#allocation4 + $0x748] sm:$0xff]
    %v330 = vld [vmem:[#allocation4 + $0x750] sm:$0xff]
    %v331 = vld [vmem:[#allocation4 + $0x758] sm:$0xff]
    %v332 = vld [vmem:[#allocation4 + $0x760] sm:$0xff]
    %v333 = vld [vmem:[#allocation4 + $0x768] sm:$0xff]
    %v334 = vld [vmem:[#allocation4 + $0x770] sm:$0xff]
    %v335 = vld [vmem:[#allocation4 + $0x778] sm:$0xff]
    %v336 = vld [vmem:[#allocation4 + $0x780] sm:$0xff]
    %v337 = vld [vmem:[#allocation4 + $0x788] sm:$0xff]
    %v338 = vld [vmem:[#allocation4 + $0x790] sm:$0xff]
    %v339 = vld [vmem:[#allocation4 + $0x798] sm:$0xff]
    %v340 = vld [vmem:[#allocation4 + $0x7a0] sm:$0xff]
    %v341 = vld [vmem:[#allocation4 + $0x7a8] sm:$0xff]
    %v342 = vld [vmem:[#allocation4 + $0x7b0] sm:$0xff]
    %v343 = vld [vmem:[#allocation4 + $0x7b8] sm:$0xff]
    %v344 = vld [vmem:[#allocation4 + $0x7c0] sm:$0xff]
    %v345 = vld [vmem:[#allocation4 + $0x7c8] sm:$0xff]
    %v346 = vld [vmem:[%s2] sm:$0xf]
    %v348 = vlaneseq
    %v349 = vshrl.u32 %v348, 7
    %v350 = vsub.s32 0, %v349
    %v351 = vrot.slane %v346, %v350
    %v352 = vlaneseq
    %v353 = vshrl.u32 %v352, 7
    %v354 = vsub.s32 1, %v353
    %v355 = vrot.slane %v346, %v354
    %v356 = vlaneseq
    %v357 = vshrl.u32 %v356, 7
    %v358 = vsub.s32 2, %v357
    %v359 = vrot.slane %v346, %v358
    %v360 = vlaneseq
    %v361 = vshrl.u32 %v360, 7
    %v362 = vsub.s32 3, %v361
    %v363 = vrot.slane %v346, %v362
    %v618 = vunpack.c.l.b16 %v96
    %v619 = vunpack.c.h.b16 %v96
    %v620 = vunpack.c.l.b16 %v97
    %v621 = vunpack.c.h.b16 %v97
    %v622 = vunpack.c.l.b16 %v98
    %v623 = vunpack.c.h.b16 %v98
    %v624 = vunpack.c.l.b16 %v99
    %v625 = vunpack.c.h.b16 %v99
    %v626 = vunpack.c.l.b16 %v100
    %v627 = vunpack.c.h.b16 %v100
    %v628 = vunpack.c.l.b16 %v101
    %v629 = vunpack.c.h.b16 %v101
    %v630 = vunpack.c.l.b16 %v102
    %v631 = vunpack.c.h.b16 %v102
    %v632 = vunpack.c.l.b16 %v103
    %v633 = vunpack.c.h.b16 %v103
    %v634 = vunpack.c.l.b16 %v104
    %v635 = vunpack.c.h.b16 %v104
    %v636 = vunpack.c.l.b16 %v105
    %v637 = vunpack.c.h.b16 %v105
    %v638 = vunpack.c.l.b16 %v106
    %v639 = vunpack.c.h.b16 %v106
    %v640 = vunpack.c.l.b16 %v107
    %v641 = vunpack.c.h.b16 %v107
    %v642 = vunpack.c.l.b16 %v108
    %v643 = vunpack.c.h.b16 %v108
    %v644 = vunpack.c.l.b16 %v109
    %v645 = vunpack.c.h.b16 %v109
    %v646 = vunpack.c.l.b16 %v110
    %v647 = vunpack.c.h.b16 %v110
    %v648 = vunpack.c.l.b16 %v111
    %v649 = vunpack.c.h.b16 %v111
    %v650 = vunpack.c.l.b16 %v112
    %v651 = vunpack.c.h.b16 %v112
    %v652 = vunpack.c.l.b16 %v113
    %v653 = vunpack.c.h.b16 %v113
    %v654 = vunpack.c.l.b16 %v114
    %v655 = vunpack.c.h.b16 %v114
    %v656 = vunpack.c.l.b16 %v115
    %v657 = vunpack.c.h.b16 %v115
    %v658 = vunpack.c.l.b16 %v116
    %v659 = vunpack.c.h.b16 %v116
    %v660 = vunpack.c.l.b16 %v117
    %v661 = vunpack.c.h.b16 %v117
    %v662 = vunpack.c.l.b16 %v118
    %v663 = vunpack.c.h.b16 %v118
    %v664 = vunpack.c.l.b16 %v119
    %v665 = vunpack.c.h.b16 %v119
    %v666 = vunpack.c.l.b16 %v120
    %v667 = vunpack.c.h.b16 %v120
    %v668 = vunpack.c.l.b16 %v121
    %v669 = vunpack.c.h.b16 %v121
    %v670 = vunpack.c.l.b16 %v122
    %v671 = vunpack.c.h.b16 %v122
    %v672 = vunpack.c.l.b16 %v123
    %v673 = vunpack.c.h.b16 %v123
    %v674 = vunpack.c.l.b16 %v124
    %v675 = vunpack.c.h.b16 %v124
    %v676 = vunpack.c.l.b16 %v125
    %v677 = vunpack.c.h.b16 %v125
    %v678 = vunpack.c.l.b16 %v126
    %v679 = vunpack.c.h.b16 %v126
    %v680 = vunpack.c.l.b16 %v127
    %v681 = vunpack.c.h.b16 %v127
    %v682 = vunpack.c.l.b16 %v128
    %v683 = vunpack.c.h.b16 %v128
    %v684 = vunpack.c.l.b16 %v129
    %v685 = vunpack.c.h.b16 %v129
    %v686 = vunpack.c.l.b16 %v130
    %v687 = vunpack.c.h.b16 %v130
    %v688 = vunpack.c.l.b16 %v131
    %v689 = vunpack.c.h.b16 %v131
    %v690 = vunpack.c.l.b16 %v132
    %v691 = vunpack.c.h.b16 %v132
    %v692 = vunpack.c.l.b16 %v133
    %v693 = vunpack.c.h.b16 %v133
    %v694 = vunpack.c.l.b16 %v134
    %v695 = vunpack.c.h.b16 %v134
    %v696 = vunpack.c.l.b16 %v135
    %v697 = vunpack.c.h.b16 %v135
    %v698 = vunpack.c.l.b16 %v136
    %v699 = vunpack.c.h.b16 %v136
    %v700 = vunpack.c.l.b16 %v137
    %v701 = vunpack.c.h.b16 %v137
    %v702 = vunpack.c.l.b16 %v138
    %v703 = vunpack.c.h.b16 %v138
    %v704 = vunpack.c.l.b16 %v139
    %v705 = vunpack.c.h.b16 %v139
    %v706 = vunpack.c.l.b16 %v140
    %v707 = vunpack.c.h.b16 %v140
    %v708 = vunpack.c.l.b16 %v141
    %v709 = vunpack.c.h.b16 %v141
    %v710 = vunpack.c.l.b16 %v142
    %v711 = vunpack.c.h.b16 %v142
    %v712 = vunpack.c.l.b16 %v143
    %v713 = vunpack.c.h.b16 %v143
    %v714 = vunpack.c.l.b16 %v144
    %v715 = vunpack.c.h.b16 %v144
    %v716 = vunpack.c.l.b16 %v145
    %v717 = vunpack.c.h.b16 %v145
    %v718 = vunpack.c.l.b16 %v146
    %v719 = vunpack.c.h.b16 %v146
    %v720 = vunpack.c.l.b16 %v147
    %v721 = vunpack.c.h.b16 %v147
    %v722 = vunpack.c.l.b16 %v148
    %v723 = vunpack.c.h.b16 %v148
    %v724 = vunpack.c.l.b16 %v149
    %v725 = vunpack.c.h.b16 %v149
    %v726 = vunpack.c.l.b16 %v150
    %v727 = vunpack.c.h.b16 %v150
    %v728 = vunpack.c.l.b16 %v151
    %v729 = vunpack.c.h.b16 %v151
    %v730 = vunpack.c.l.b16 %v152
    %v731 = vunpack.c.h.b16 %v152
    %v732 = vunpack.c.l.b16 %v153
    %v733 = vunpack.c.h.b16 %v153
    %v734 = vunpack.c.l.b16 %v154
    %v735 = vunpack.c.h.b16 %v154
    %v736 = vunpack.c.l.b16 %v155
    %v737 = vunpack.c.h.b16 %v155
    %v738 = vunpack.c.l.b16 %v156
    %v739 = vunpack.c.h.b16 %v156
    %v740 = vunpack.c.l.b16 %v157
    %v741 = vunpack.c.h.b16 %v157
    %v742 = vunpack.c.l.b16 %v158
    %v743 = vunpack.c.h.b16 %v158
    %v744 = vunpack.c.l.b16 %v159
    %v745 = vunpack.c.h.b16 %v159
    %v746 = vunpack.c.l.b16 %v160
    %v747 = vunpack.c.h.b16 %v160
    %v748 = vunpack.c.l.b16 %v161
    %v749 = vunpack.c.h.b16 %v161
    %v750 = vunpack.c.l.b16 %v162
    %v751 = vunpack.c.h.b16 %v162
    %v752 = vunpack.c.l.b16 %v163
    %v753 = vunpack.c.h.b16 %v163
    %v754 = vunpack.c.l.b16 %v164
    %v755 = vunpack.c.h.b16 %v164
    %v756 = vunpack.c.l.b16 %v165
    %v757 = vunpack.c.h.b16 %v165
    %v758 = vunpack.c.l.b16 %v166
    %v759 = vunpack.c.h.b16 %v166
    %v760 = vunpack.c.l.b16 %v167
    %v761 = vunpack.c.h.b16 %v167
    %v762 = vunpack.c.l.b16 %v168
    %v763 = vunpack.c.h.b16 %v168
    %v764 = vunpack.c.l.b16 %v169
    %v765 = vunpack.c.h.b16 %v169
    %v766 = vunpack.c.l.b16 %v170
    %v767 = vunpack.c.h.b16 %v170
    %v768 = vunpack.c.l.b16 %v171
    %v769 = vunpack.c.h.b16 %v171
    %v770 = vunpack.c.l.b16 %v172
    %v771 = vunpack.c.h.b16 %v172
    %v772 = vunpack.c.l.b16 %v173
    %v773 = vunpack.c.h.b16 %v173
    %v774 = vunpack.c.l.b16 %v174
    %v775 = vunpack.c.h.b16 %v174
    %v776 = vunpack.c.l.b16 %v175
    %v777 = vunpack.c.h.b16 %v175
    %v778 = vunpack.c.l.b16 %v176
    %v779 = vunpack.c.h.b16 %v176
    %v780 = vunpack.c.l.b16 %v177
    %v781 = vunpack.c.h.b16 %v177
    %v782 = vunpack.c.l.b16 %v178
    %v783 = vunpack.c.h.b16 %v178
    %v784 = vunpack.c.l.b16 %v179
    %v785 = vunpack.c.h.b16 %v179
    %v786 = vunpack.c.l.b16 %v180
    %v787 = vunpack.c.h.b16 %v180
    %v788 = vunpack.c.l.b16 %v181
    %v789 = vunpack.c.h.b16 %v181
    %v790 = vunpack.c.l.b16 %v182
    %v791 = vunpack.c.h.b16 %v182
    %v792 = vunpack.c.l.b16 %v183
    %v793 = vunpack.c.h.b16 %v183
    %v794 = vunpack.c.l.b16 %v184
    %v795 = vunpack.c.h.b16 %v184
    %v796 = vunpack.c.l.b16 %v185
    %v797 = vunpack.c.h.b16 %v185
    %v798 = vunpack.c.l.b16 %v186
    %v799 = vunpack.c.h.b16 %v186
    %v800 = vunpack.c.l.b16 %v187
    %v801 = vunpack.c.h.b16 %v187
    %v802 = vunpack.c.l.b16 %v188
    %v803 = vunpack.c.h.b16 %v188
    %v804 = vunpack.c.l.b16 %v189
    %v805 = vunpack.c.h.b16 %v189
    %v806 = vunpack.c.l.b16 %v190
    %v807 = vunpack.c.h.b16 %v190
    %v808 = vunpack.c.l.b16 %v191
    %v809 = vunpack.c.h.b16 %v191
    %v810 = vunpack.c.l.b16 %v192
    %v811 = vunpack.c.h.b16 %v192
    %v812 = vunpack.c.l.b16 %v193
    %v813 = vunpack.c.h.b16 %v193
    %v814 = vunpack.c.l.b16 %v194
    %v815 = vunpack.c.h.b16 %v194
    %v816 = vunpack.c.l.b16 %v195
    %v817 = vunpack.c.h.b16 %v195
    %v818 = vunpack.c.l.b16 %v196
    %v819 = vunpack.c.h.b16 %v196
    %v820 = vunpack.c.l.b16 %v197
    %v821 = vunpack.c.h.b16 %v197
    %v822 = vunpack.c.l.b16 %v198
    %v823 = vunpack.c.h.b16 %v198
    %v824 = vunpack.c.l.b16 %v199
    %v825 = vunpack.c.h.b16 %v199
    %v826 = vunpack.c.l.b16 %v200
    %v827 = vunpack.c.h.b16 %v200
    %v828 = vunpack.c.l.b16 %v201
    %v829 = vunpack.c.h.b16 %v201
    %v830 = vunpack.c.l.b16 %v202
    %v831 = vunpack.c.h.b16 %v202
    %v832 = vunpack.c.l.b16 %v203
    %v833 = vunpack.c.h.b16 %v203
    %v834 = vunpack.c.l.b16 %v204
    %v835 = vunpack.c.h.b16 %v204
    %v836 = vunpack.c.l.b16 %v205
    %v837 = vunpack.c.h.b16 %v205
    %v838 = vunpack.c.l.b16 %v206
    %v839 = vunpack.c.h.b16 %v206
    %v840 = vunpack.c.l.b16 %v207
    %v841 = vunpack.c.h.b16 %v207
    %v842 = vunpack.c.l.b16 %v208
    %v843 = vunpack.c.h.b16 %v208
    %v844 = vunpack.c.l.b16 %v209
    %v845 = vunpack.c.h.b16 %v209
    %v846 = vunpack.c.l.b16 %v210
    %v847 = vunpack.c.h.b16 %v210
    %v848 = vunpack.c.l.b16 %v211
    %v849 = vunpack.c.h.b16 %v211
    %v850 = vunpack.c.l.b16 %v212
    %v851 = vunpack.c.h.b16 %v212
    %v852 = vunpack.c.l.b16 %v213
    %v853 = vunpack.c.h.b16 %v213
    %v854 = vunpack.c.l.b16 %v214
    %v855 = vunpack.c.h.b16 %v214
    %v856 = vunpack.c.l.b16 %v215
    %v857 = vunpack.c.h.b16 %v215
    %v858 = vunpack.c.l.b16 %v216
    %v859 = vunpack.c.h.b16 %v216
    %v860 = vunpack.c.l.b16 %v217
    %v861 = vunpack.c.h.b16 %v217
    %v862 = vunpack.c.l.b16 %v218
    %v863 = vunpack.c.h.b16 %v218
    %v864 = vunpack.c.l.b16 %v219
    %v865 = vunpack.c.h.b16 %v219
    %v866 = vunpack.c.l.b16 %v220
    %v867 = vunpack.c.h.b16 %v220
    %v868 = vunpack.c.l.b16 %v221
    %v869 = vunpack.c.h.b16 %v221
    %v870 = vunpack.c.l.b16 %v222
    %v871 = vunpack.c.h.b16 %v222
    %v872 = vunpack.c.l.b16 %v223
    %v873 = vunpack.c.h.b16 %v223
    %v874 = vunpack.c.l.b16 %v224
    %v875 = vunpack.c.h.b16 %v224
    %v876 = vunpack.c.l.b16 %v225
    %v877 = vunpack.c.h.b16 %v225
    %v878 = vunpack.c.l.b16 %v226
    %v879 = vunpack.c.h.b16 %v226
    %v880 = vunpack.c.l.b16 %v227
    %v881 = vunpack.c.h.b16 %v227
    %v882 = vunpack.c.l.b16 %v228
    %v883 = vunpack.c.h.b16 %v228
    %v884 = vunpack.c.l.b16 %v229
    %v885 = vunpack.c.h.b16 %v229
    %v886 = vunpack.c.l.b16 %v230
    %v887 = vunpack.c.h.b16 %v230
    %v888 = vunpack.c.l.b16 %v231
    %v889 = vunpack.c.h.b16 %v231
    %v890 = vunpack.c.l.b16 %v232
    %v891 = vunpack.c.h.b16 %v232
    %v892 = vunpack.c.l.b16 %v233
    %v893 = vunpack.c.h.b16 %v233
    %v894 = vunpack.c.l.b16 %v234
    %v895 = vunpack.c.h.b16 %v234
    %v896 = vunpack.c.l.b16 %v235
    %v897 = vunpack.c.h.b16 %v235
    %v898 = vunpack.c.l.b16 %v236
    %v899 = vunpack.c.h.b16 %v236
    %v900 = vunpack.c.l.b16 %v237
    %v901 = vunpack.c.h.b16 %v237
    %v902 = vunpack.c.l.b16 %v238
    %v903 = vunpack.c.h.b16 %v238
    %v904 = vunpack.c.l.b16 %v239
    %v905 = vunpack.c.h.b16 %v239
    %v906 = vunpack.c.l.b16 %v240
    %v907 = vunpack.c.h.b16 %v240
    %v908 = vunpack.c.l.b16 %v241
    %v909 = vunpack.c.h.b16 %v241
    %v910 = vunpack.c.l.b16 %v242
    %v911 = vunpack.c.h.b16 %v242
    %v912 = vunpack.c.l.b16 %v243
    %v913 = vunpack.c.h.b16 %v243
    %v914 = vunpack.c.l.b16 %v244
    %v915 = vunpack.c.h.b16 %v244
    %v916 = vunpack.c.l.b16 %v245
    %v917 = vunpack.c.h.b16 %v245
    %v918 = vunpack.c.l.b16 %v246
    %v919 = vunpack.c.h.b16 %v246
    %v920 = vunpack.c.l.b16 %v247
    %v921 = vunpack.c.h.b16 %v247
    %v922 = vunpack.c.l.b16 %v248
    %v923 = vunpack.c.h.b16 %v248
    %v924 = vunpack.c.l.b16 %v249
    %v925 = vunpack.c.h.b16 %v249
    %v926 = vunpack.c.l.b16 %v250
    %v927 = vunpack.c.h.b16 %v250
    %v928 = vunpack.c.l.b16 %v251
    %v929 = vunpack.c.h.b16 %v251
    %v930 = vunpack.c.l.b16 %v252
    %v931 = vunpack.c.h.b16 %v252
    %v932 = vunpack.c.l.b16 %v253
    %v933 = vunpack.c.h.b16 %v253
    %v934 = vunpack.c.l.b16 %v254
    %v935 = vunpack.c.h.b16 %v254
    %v936 = vunpack.c.l.b16 %v255
    %v937 = vunpack.c.h.b16 %v255
    %v938 = vunpack.c.l.b16 %v256
    %v939 = vunpack.c.h.b16 %v256
    %v940 = vunpack.c.l.b16 %v257
    %v941 = vunpack.c.h.b16 %v257
    %v942 = vunpack.c.l.b16 %v258
    %v943 = vunpack.c.h.b16 %v258
    %v944 = vunpack.c.l.b16 %v259
    %v945 = vunpack.c.h.b16 %v259
    %v946 = vunpack.c.l.b16 %v260
    %v947 = vunpack.c.h.b16 %v260
    %v948 = vunpack.c.l.b16 %v261
    %v949 = vunpack.c.h.b16 %v261
    %v950 = vunpack.c.l.b16 %v262
    %v951 = vunpack.c.h.b16 %v262
    %v952 = vunpack.c.l.b16 %v263
    %v953 = vunpack.c.h.b16 %v263
    %v954 = vunpack.c.l.b16 %v264
    %v955 = vunpack.c.h.b16 %v264
    %v956 = vunpack.c.l.b16 %v265
    %v957 = vunpack.c.h.b16 %v265
    %v958 = vunpack.c.l.b16 %v266
    %v959 = vunpack.c.h.b16 %v266
    %v960 = vunpack.c.l.b16 %v267
    %v961 = vunpack.c.h.b16 %v267
    %v962 = vunpack.c.l.b16 %v268
    %v963 = vunpack.c.h.b16 %v268
    %v964 = vunpack.c.l.b16 %v269
    %v965 = vunpack.c.h.b16 %v269
    %v966 = vunpack.c.l.b16 %v270
    %v967 = vunpack.c.h.b16 %v270
    %v968 = vunpack.c.l.b16 %v271
    %v969 = vunpack.c.h.b16 %v271
    %v970 = vunpack.c.l.b16 %v272
    %v971 = vunpack.c.h.b16 %v272
    %v972 = vunpack.c.l.b16 %v273
    %v973 = vunpack.c.h.b16 %v273
    %v974 = vunpack.c.l.b16 %v274
    %v975 = vunpack.c.h.b16 %v274
    %v976 = vunpack.c.l.b16 %v275
    %v977 = vunpack.c.h.b16 %v275
    %v978 = vunpack.c.l.b16 %v276
    %v979 = vunpack.c.h.b16 %v276
    %v980 = vunpack.c.l.b16 %v277
    %v981 = vunpack.c.h.b16 %v277
    %v982 = vunpack.c.l.b16 %v278
    %v983 = vunpack.c.h.b16 %v278
    %v984 = vunpack.c.l.b16 %v279
    %v985 = vunpack.c.h.b16 %v279
    %v986 = vunpack.c.l.b16 %v280
    %v987 = vunpack.c.h.b16 %v280
    %v988 = vunpack.c.l.b16 %v281
    %v989 = vunpack.c.h.b16 %v281
    %v990 = vunpack.c.l.b16 %v282
    %v991 = vunpack.c.h.b16 %v282
    %v992 = vunpack.c.l.b16 %v283
    %v993 = vunpack.c.h.b16 %v283
    %v994 = vunpack.c.l.b16 %v284
    %v995 = vunpack.c.h.b16 %v284
    %v996 = vunpack.c.l.b16 %v285
    %v997 = vunpack.c.h.b16 %v285
    %v998 = vunpack.c.l.b16 %v286
    %v999 = vunpack.c.h.b16 %v286
    %v1000 = vunpack.c.l.b16 %v287
    %v1001 = vunpack.c.h.b16 %v287
    %v1002 = vunpack.c.l.b16 %v288
    %v1003 = vunpack.c.h.b16 %v288
    %v1004 = vunpack.c.l.b16 %v289
    %v1005 = vunpack.c.h.b16 %v289
    %v1006 = vunpack.c.l.b16 %v290
    %v1007 = vunpack.c.h.b16 %v290
    %v1008 = vunpack.c.l.b16 %v291
    %v1009 = vunpack.c.h.b16 %v291
    %v1010 = vunpack.c.l.b16 %v292
    %v1011 = vunpack.c.h.b16 %v292
    %v1012 = vunpack.c.l.b16 %v293
    %v1013 = vunpack.c.h.b16 %v293
    %v1014 = vunpack.c.l.b16 %v294
    %v1015 = vunpack.c.h.b16 %v294
    %v1016 = vunpack.c.l.b16 %v295
    %v1017 = vunpack.c.h.b16 %v295
    %v1018 = vunpack.c.l.b16 %v296
    %v1019 = vunpack.c.h.b16 %v296
    %v1020 = vunpack.c.l.b16 %v297
    %v1021 = vunpack.c.h.b16 %v297
    %v1022 = vunpack.c.l.b16 %v298
    %v1023 = vunpack.c.h.b16 %v298
    %v1024 = vunpack.c.l.b16 %v299
    %v1025 = vunpack.c.h.b16 %v299
    %v1026 = vunpack.c.l.b16 %v300
    %v1027 = vunpack.c.h.b16 %v300
    %v1028 = vunpack.c.l.b16 %v301
    %v1029 = vunpack.c.h.b16 %v301
    %v1030 = vunpack.c.l.b16 %v302
    %v1031 = vunpack.c.h.b16 %v302
    %v1032 = vunpack.c.l.b16 %v303
    %v1033 = vunpack.c.h.b16 %v303
    %v1034 = vunpack.c.l.b16 %v304
    %v1035 = vunpack.c.h.b16 %v304
    %v1036 = vunpack.c.l.b16 %v305
    %v1037 = vunpack.c.h.b16 %v305
    %v1038 = vunpack.c.l.b16 %v306
    %v1039 = vunpack.c.h.b16 %v306
    %v1040 = vunpack.c.l.b16 %v307
    %v1041 = vunpack.c.h.b16 %v307
    %v1042 = vunpack.c.l.b16 %v308
    %v1043 = vunpack.c.h.b16 %v308
    %v1044 = vunpack.c.l.b16 %v309
    %v1045 = vunpack.c.h.b16 %v309
    %v1046 = vunpack.c.l.b16 %v310
    %v1047 = vunpack.c.h.b16 %v310
    %v1048 = vunpack.c.l.b16 %v311
    %v1049 = vunpack.c.h.b16 %v311
    %v1050 = vunpack.c.l.b16 %v312
    %v1051 = vunpack.c.h.b16 %v312
    %v1052 = vunpack.c.l.b16 %v313
    %v1053 = vunpack.c.h.b16 %v313
    %v1054 = vunpack.c.l.b16 %v314
    %v1055 = vunpack.c.h.b16 %v314
    %v1056 = vunpack.c.l.b16 %v315
    %v1057 = vunpack.c.h.b16 %v315
    %v1058 = vunpack.c.l.b16 %v316
    %v1059 = vunpack.c.h.b16 %v316
    %v1060 = vunpack.c.l.b16 %v317
    %v1061 = vunpack.c.h.b16 %v317
    %v1062 = vunpack.c.l.b16 %v318
    %v1063 = vunpack.c.h.b16 %v318
    %v1064 = vunpack.c.l.b16 %v319
    %v1065 = vunpack.c.h.b16 %v319
    %v1066 = vunpack.c.l.b16 %v320
    %v1067 = vunpack.c.h.b16 %v320
    %v1068 = vunpack.c.l.b16 %v321
    %v1069 = vunpack.c.h.b16 %v321
    %v1070 = vunpack.c.l.b16 %v322
    %v1071 = vunpack.c.h.b16 %v322
    %v1072 = vunpack.c.l.b16 %v323
    %v1073 = vunpack.c.h.b16 %v323
    %v1074 = vunpack.c.l.b16 %v324
    %v1075 = vunpack.c.h.b16 %v324
    %v1076 = vunpack.c.l.b16 %v325
    %v1077 = vunpack.c.h.b16 %v325
    %v1078 = vunpack.c.l.b16 %v326
    %v1079 = vunpack.c.h.b16 %v326
    %v1080 = vunpack.c.l.b16 %v327
    %v1081 = vunpack.c.h.b16 %v327
    %v1082 = vunpack.c.l.b16 %v328
    %v1083 = vunpack.c.h.b16 %v328
    %v1084 = vunpack.c.l.b16 %v329
    %v1085 = vunpack.c.h.b16 %v329
    %v1086 = vunpack.c.l.b16 %v330
    %v1087 = vunpack.c.h.b16 %v330
    %v1088 = vunpack.c.l.b16 %v331
    %v1089 = vunpack.c.h.b16 %v331
    %v1090 = vunpack.c.l.b16 %v332
    %v1091 = vunpack.c.h.b16 %v332
    %v1092 = vunpack.c.l.b16 %v333
    %v1093 = vunpack.c.h.b16 %v333
    %v1094 = vunpack.c.l.b16 %v334
    %v1095 = vunpack.c.h.b16 %v334
    %v1096 = vunpack.c.l.b16 %v335
    %v1097 = vunpack.c.h.b16 %v335
    %v1098 = vunpack.c.l.b16 %v336
    %v1099 = vunpack.c.h.b16 %v336
    %v1100 = vunpack.c.l.b16 %v337
    %v1101 = vunpack.c.h.b16 %v337
    %v1102 = vunpack.c.l.b16 %v338
    %v1103 = vunpack.c.h.b16 %v338
    %v1104 = vunpack.c.l.b16 %v339
    %v1105 = vunpack.c.h.b16 %v339
    %v1106 = vunpack.c.l.b16 %v340
    %v1107 = vunpack.c.h.b16 %v340
    %v1108 = vunpack.c.l.b16 %v341
    %v1109 = vunpack.c.h.b16 %v341
    %v1110 = vunpack.c.l.b16 %v342
    %v1111 = vunpack.c.h.b16 %v342
    %v1112 = vunpack.c.l.b16 %v343
    %v1113 = vunpack.c.h.b16 %v343
    %v1114 = vunpack.c.l.b16 %v344
    %v1115 = vunpack.c.h.b16 %v344
    %v1116 = vunpack.c.l.b16 %v345
    %v1117 = vunpack.c.h.b16 %v345
    %v1118 = vpack.c.b16 %v622, %v618
    %v1119 = vpack.c.b16 %v623, %v619
    %v1120 = vpack.c.b16 %v624, %v620
    %v1121 = vpack.c.b16 %v625, %v621
    %v1122 = vpack.c.b16 %v630, %v626
    %v1123 = vpack.c.b16 %v631, %v627
    %v1124 = vpack.c.b16 %v632, %v628
    %v1125 = vpack.c.b16 %v633, %v629
    %v1126 = vpack.c.b16 %v638, %v634
    %v1127 = vpack.c.b16 %v639, %v635
    %v1128 = vpack.c.b16 %v640, %v636
    %v1129 = vpack.c.b16 %v641, %v637
    %v1130 = vpack.c.b16 %v646, %v642
    %v1131 = vpack.c.b16 %v647, %v643
    %v1132 = vpack.c.b16 %v648, %v644
    %v1133 = vpack.c.b16 %v649, %v645
    %v1134 = vpack.c.b16 %v654, %v650
    %v1135 = vpack.c.b16 %v655, %v651
    %v1136 = vpack.c.b16 %v656, %v652
    %v1137 = vpack.c.b16 %v657, %v653
    %v1138 = vpack.c.b16 %v662, %v658
    %v1139 = vpack.c.b16 %v663, %v659
    %v1140 = vpack.c.b16 %v664, %v660
    %v1141 = vpack.c.b16 %v665, %v661
    %v1142 = vpack.c.b16 %v670, %v666
    %v1143 = vpack.c.b16 %v671, %v667
    %v1144 = vpack.c.b16 %v672, %v668
    %v1145 = vpack.c.b16 %v673, %v669
    %v1146 = vpack.c.b16 %v678, %v674
    %v1147 = vpack.c.b16 %v679, %v675
    %v1148 = vpack.c.b16 %v680, %v676
    %v1149 = vpack.c.b16 %v681, %v677
    %v1150 = vpack.c.b16 %v686, %v682
    %v1151 = vpack.c.b16 %v687, %v683
    %v1152 = vpack.c.b16 %v688, %v684
    %v1153 = vpack.c.b16 %v689, %v685
    %v1154 = vpack.c.b16 %v694, %v690
    %v1155 = vpack.c.b16 %v695, %v691
    %v1156 = vpack.c.b16 %v696, %v692
    %v1157 = vpack.c.b16 %v697, %v693
    %v1158 = vpack.c.b16 %v702, %v698
    %v1159 = vpack.c.b16 %v703, %v699
    %v1160 = vpack.c.b16 %v704, %v700
    %v1161 = vpack.c.b16 %v705, %v701
    %v1162 = vpack.c.b16 %v710, %v706
    %v1163 = vpack.c.b16 %v711, %v707
    %v1164 = vpack.c.b16 %v712, %v708
    %v1165 = vpack.c.b16 %v713, %v709
    %v1166 = vpack.c.b16 %v718, %v714
    %v1167 = vpack.c.b16 %v719, %v715
    %v1168 = vpack.c.b16 %v720, %v716
    %v1169 = vpack.c.b16 %v721, %v717
    %v1170 = vpack.c.b16 %v726, %v722
    %v1171 = vpack.c.b16 %v727, %v723
    %v1172 = vpack.c.b16 %v728, %v724
    %v1173 = vpack.c.b16 %v729, %v725
    %v1174 = vpack.c.b16 %v734, %v730
    %v1175 = vpack.c.b16 %v735, %v731
    %v1176 = vpack.c.b16 %v736, %v732
    %v1177 = vpack.c.b16 %v737, %v733
    %v1178 = vpack.c.b16 %v742, %v738
    %v1179 = vpack.c.b16 %v743, %v739
    %v1180 = vpack.c.b16 %v744, %v740
    %v1181 = vpack.c.b16 %v745, %v741
    %v1182 = vpack.c.b16 %v750, %v746
    %v1183 = vpack.c.b16 %v751, %v747
    %v1184 = vpack.c.b16 %v752, %v748
    %v1185 = vpack.c.b16 %v753, %v749
    %v1186 = vpack.c.b16 %v758, %v754
    %v1187 = vpack.c.b16 %v759, %v755
    %v1188 = vpack.c.b16 %v760, %v756
    %v1189 = vpack.c.b16 %v761, %v757
    %v1190 = vpack.c.b16 %v766, %v762
    %v1191 = vpack.c.b16 %v767, %v763
    %v1192 = vpack.c.b16 %v768, %v764
    %v1193 = vpack.c.b16 %v769, %v765
    %v1194 = vpack.c.b16 %v774, %v770
    %v1195 = vpack.c.b16 %v775, %v771
    %v1196 = vpack.c.b16 %v776, %v772
    %v1197 = vpack.c.b16 %v777, %v773
    %v1198 = vpack.c.b16 %v782, %v778
    %v1199 = vpack.c.b16 %v783, %v779
    %v1200 = vpack.c.b16 %v784, %v780
    %v1201 = vpack.c.b16 %v785, %v781
    %v1202 = vpack.c.b16 %v790, %v786
    %v1203 = vpack.c.b16 %v791, %v787
    %v1204 = vpack.c.b16 %v792, %v788
    %v1205 = vpack.c.b16 %v793, %v789
    %v1206 = vpack.c.b16 %v798, %v794
    %v1207 = vpack.c.b16 %v799, %v795
    %v1208 = vpack.c.b16 %v800, %v796
    %v1209 = vpack.c.b16 %v801, %v797
    %v1210 = vpack.c.b16 %v806, %v802
    %v1211 = vpack.c.b16 %v807, %v803
    %v1212 = vpack.c.b16 %v808, %v804
    %v1213 = vpack.c.b16 %v809, %v805
    %v1214 = vpack.c.b16 %v814, %v810
    %v1215 = vpack.c.b16 %v815, %v811
    %v1216 = vpack.c.b16 %v816, %v812
    %v1217 = vpack.c.b16 %v817, %v813
    %v1218 = vpack.c.b16 %v822, %v818
    %v1219 = vpack.c.b16 %v823, %v819
    %v1220 = vpack.c.b16 %v824, %v820
    %v1221 = vpack.c.b16 %v825, %v821
    %v1222 = vpack.c.b16 %v830, %v826
    %v1223 = vpack.c.b16 %v831, %v827
    %v1224 = vpack.c.b16 %v832, %v828
    %v1225 = vpack.c.b16 %v833, %v829
    %v1226 = vpack.c.b16 %v838, %v834
    %v1227 = vpack.c.b16 %v839, %v835
    %v1228 = vpack.c.b16 %v840, %v836
    %v1229 = vpack.c.b16 %v841, %v837
    %v1230 = vpack.c.b16 %v846, %v842
    %v1231 = vpack.c.b16 %v847, %v843
    %v1232 = vpack.c.b16 %v848, %v844
    %v1233 = vpack.c.b16 %v849, %v845
    %v1234 = vpack.c.b16 %v854, %v850
    %v1235 = vpack.c.b16 %v855, %v851
    %v1236 = vpack.c.b16 %v856, %v852
    %v1237 = vpack.c.b16 %v857, %v853
    %v1238 = vpack.c.b16 %v862, %v858
    %v1239 = vpack.c.b16 %v863, %v859
    %v1240 = vpack.c.b16 %v864, %v860
    %v1241 = vpack.c.b16 %v865, %v861
    %v1242 = vpack.c.b16 %v870, %v866
    %v1243 = vpack.c.b16 %v871, %v867
    %v1244 = vpack.c.b16 %v872, %v868
    %v1245 = vpack.c.b16 %v873, %v869
    %v1246 = vpack.c.b16 %v878, %v874
    %v1247 = vpack.c.b16 %v879, %v875
    %v1248 = vpack.c.b16 %v880, %v876
    %v1249 = vpack.c.b16 %v881, %v877
    %v1250 = vpack.c.b16 %v886, %v882
    %v1251 = vpack.c.b16 %v887, %v883
    %v1252 = vpack.c.b16 %v888, %v884
    %v1253 = vpack.c.b16 %v889, %v885
    %v1254 = vpack.c.b16 %v894, %v890
    %v1255 = vpack.c.b16 %v895, %v891
    %v1256 = vpack.c.b16 %v896, %v892
    %v1257 = vpack.c.b16 %v897, %v893
    %v1258 = vpack.c.b16 %v902, %v898
    %v1259 = vpack.c.b16 %v903, %v899
    %v1260 = vpack.c.b16 %v904, %v900
    %v1261 = vpack.c.b16 %v905, %v901
    %v1262 = vpack.c.b16 %v910, %v906
    %v1263 = vpack.c.b16 %v911, %v907
    %v1264 = vpack.c.b16 %v912, %v908
    %v1265 = vpack.c.b16 %v913, %v909
    %v1266 = vpack.c.b16 %v918, %v914
    %v1267 = vpack.c.b16 %v919, %v915
    %v1268 = vpack.c.b16 %v920, %v916
    %v1269 = vpack.c.b16 %v921, %v917
    %v1270 = vpack.c.b16 %v926, %v922
    %v1271 = vpack.c.b16 %v927, %v923
    %v1272 = vpack.c.b16 %v928, %v924
    %v1273 = vpack.c.b16 %v929, %v925
    %v1274 = vpack.c.b16 %v934, %v930
    %v1275 = vpack.c.b16 %v935, %v931
    %v1276 = vpack.c.b16 %v936, %v932
    %v1277 = vpack.c.b16 %v937, %v933
    %v1278 = vpack.c.b16 %v942, %v938
    %v1279 = vpack.c.b16 %v943, %v939
    %v1280 = vpack.c.b16 %v944, %v940
    %v1281 = vpack.c.b16 %v945, %v941
    %v1282 = vpack.c.b16 %v950, %v946
    %v1283 = vpack.c.b16 %v951, %v947
    %v1284 = vpack.c.b16 %v952, %v948
    %v1285 = vpack.c.b16 %v953, %v949
    %v1286 = vpack.c.b16 %v958, %v954
    %v1287 = vpack.c.b16 %v959, %v955
    %v1288 = vpack.c.b16 %v960, %v956
    %v1289 = vpack.c.b16 %v961, %v957
    %v1290 = vpack.c.b16 %v966, %v962
    %v1291 = vpack.c.b16 %v967, %v963
    %v1292 = vpack.c.b16 %v968, %v964
    %v1293 = vpack.c.b16 %v969, %v965
    %v1294 = vpack.c.b16 %v974, %v970
    %v1295 = vpack.c.b16 %v975, %v971
    %v1296 = vpack.c.b16 %v976, %v972
    %v1297 = vpack.c.b16 %v977, %v973
    %v1298 = vpack.c.b16 %v982, %v978
    %v1299 = vpack.c.b16 %v983, %v979
    %v1300 = vpack.c.b16 %v984, %v980
    %v1301 = vpack.c.b16 %v985, %v981
    %v1302 = vpack.c.b16 %v990, %v986
    %v1303 = vpack.c.b16 %v991, %v987
    %v1304 = vpack.c.b16 %v992, %v988
    %v1305 = vpack.c.b16 %v993, %v989
    %v1306 = vpack.c.b16 %v998, %v994
    %v1307 = vpack.c.b16 %v999, %v995
    %v1308 = vpack.c.b16 %v1000, %v996
    %v1309 = vpack.c.b16 %v1001, %v997
    %v1310 = vpack.c.b16 %v1006, %v1002
    %v1311 = vpack.c.b16 %v1007, %v1003
    %v1312 = vpack.c.b16 %v1008, %v1004
    %v1313 = vpack.c.b16 %v1009, %v1005
    %v1314 = vpack.c.b16 %v1014, %v1010
    %v1315 = vpack.c.b16 %v1015, %v1011
    %v1316 = vpack.c.b16 %v1016, %v1012
    %v1317 = vpack.c.b16 %v1017, %v1013
    %v1318 = vpack.c.b16 %v1022, %v1018
    %v1319 = vpack.c.b16 %v1023, %v1019
    %v1320 = vpack.c.b16 %v1024, %v1020
    %v1321 = vpack.c.b16 %v1025, %v1021
    %v1322 = vpack.c.b16 %v1030, %v1026
    %v1323 = vpack.c.b16 %v1031, %v1027
    %v1324 = vpack.c.b16 %v1032, %v1028
    %v1325 = vpack.c.b16 %v1033, %v1029
    %v1326 = vpack.c.b16 %v1038, %v1034
    %v1327 = vpack.c.b16 %v1039, %v1035
    %v1328 = vpack.c.b16 %v1040, %v1036
    %v1329 = vpack.c.b16 %v1041, %v1037
    %v1330 = vpack.c.b16 %v1046, %v1042
    %v1331 = vpack.c.b16 %v1047, %v1043
    %v1332 = vpack.c.b16 %v1048, %v1044
    %v1333 = vpack.c.b16 %v1049, %v1045
    %v1334 = vpack.c.b16 %v1054, %v1050
    %v1335 = vpack.c.b16 %v1055, %v1051
    %v1336 = vpack.c.b16 %v1056, %v1052
    %v1337 = vpack.c.b16 %v1057, %v1053
    %v1338 = vpack.c.b16 %v1062, %v1058
    %v1339 = vpack.c.b16 %v1063, %v1059
    %v1340 = vpack.c.b16 %v1064, %v1060
    %v1341 = vpack.c.b16 %v1065, %v1061
    %v1342 = vpack.c.b16 %v1070, %v1066
    %v1343 = vpack.c.b16 %v1071, %v1067
    %v1344 = vpack.c.b16 %v1072, %v1068
    %v1345 = vpack.c.b16 %v1073, %v1069
    %v1346 = vpack.c.b16 %v1078, %v1074
    %v1347 = vpack.c.b16 %v1079, %v1075
    %v1348 = vpack.c.b16 %v1080, %v1076
    %v1349 = vpack.c.b16 %v1081, %v1077
    %v1350 = vpack.c.b16 %v1086, %v1082
    %v1351 = vpack.c.b16 %v1087, %v1083
    %v1352 = vpack.c.b16 %v1088, %v1084
    %v1353 = vpack.c.b16 %v1089, %v1085
    %v1354 = vpack.c.b16 %v1094, %v1090
    %v1355 = vpack.c.b16 %v1095, %v1091
    %v1356 = vpack.c.b16 %v1096, %v1092
    %v1357 = vpack.c.b16 %v1097, %v1093
    %v1358 = vpack.c.b16 %v1102, %v1098
    %v1359 = vpack.c.b16 %v1103, %v1099
    %v1360 = vpack.c.b16 %v1104, %v1100
    %v1361 = vpack.c.b16 %v1105, %v1101
    %v1362 = vpack.c.b16 %v1110, %v1106
    %v1363 = vpack.c.b16 %v1111, %v1107
    %v1364 = vpack.c.b16 %v1112, %v1108
    %v1365 = vpack.c.b16 %v1113, %v1109
    %v1366 = vpack.c.b16 %v1114, %v1114
    %v1367 = vpack.c.b16 %v1115, %v1115
    %v1368 = vpack.c.b16 %v1116, %v1116
    %v1369 = vpack.c.b16 %v1117, %v1117
    %vm1618 = vcmask 850944
    %v1620 = vsel %vm1618, %v95, 0
    %vm1622 = vcmask 1043456
    %v1624 = vsel %vm1622, %v1366, 0
    %v1627 = vsel %vm1622, %v1367, 0
    %v1630 = vsel %vm1622, %v1368, 0
    %v1633 = vsel %vm1622, %v1369, 0
    %1635 = vmatprep.subr.bf16.mxu0 %v1119
    %1636 = vmatpush1.bf16.msra.mxu0 %v1118
    %1637 = vmatprep.subr.bf16.mxu0 %v1123
    %1638 = vmatpush1.bf16.msra.mxu0 %v1122
    %1639 = vmatprep.subr.bf16.mxu0 %v1127
    %1640 = vmatpush1.bf16.msra.mxu0 %v1126
    %1641 = vmatprep.subr.bf16.mxu0 %v1131
    %1642 = vmatpush1.bf16.msra.mxu0 %v1130
    %1643 = vmatprep.subr.bf16.mxu0 %v1135
    %1644 = vmatpush1.bf16.msra.mxu0 %v1134
    %1645 = vmatprep.subr.bf16.mxu0 %v1139
    %1646 = vmatpush1.bf16.msra.mxu0 %v1138
    %1647 = vmatprep.subr.bf16.mxu0 %v1143
    %1648 = vmatpush1.bf16.msra.mxu0 %v1142
    %1649 = vmatprep.subr.bf16.mxu0 %v1147
    %1650 = vmatpush1.bf16.msra.mxu0 %v1146
    %1651 = vmatprep.subr.bf16.mxu0 %v1151
    %1652 = vmatpush1.bf16.msra.mxu0 %v1150
    %1653 = vmatprep.subr.bf16.mxu0 %v1155
    %1654 = vmatpush1.bf16.msra.mxu0 %v1154
    %1655 = vmatprep.subr.bf16.mxu0 %v1159
    %1656 = vmatpush1.bf16.msra.mxu0 %v1158
    %1657 = vmatprep.subr.bf16.mxu0 %v1163
    %1658 = vmatpush1.bf16.msra.mxu0 %v1162
    %1659 = vmatprep.subr.bf16.mxu0 %v1167
    %1660 = vmatpush1.bf16.msra.mxu0 %v1166
    %1661 = vmatprep.subr.bf16.mxu0 %v1171
    %1662 = vmatpush1.bf16.msra.mxu0 %v1170
    %1663 = vmatprep.subr.bf16.mxu0 %v1175
    %1664 = vmatpush1.bf16.msra.mxu0 %v1174
    %1665 = vmatprep.subr.bf16.mxu0 %v1179
    %1666 = vmatpush1.bf16.msra.mxu0 %v1178
    %1667 = vmatprep.mubr.bf16.mxu0 %v89
    %1668 = vmatmul.mubr.bf16.gmra.mrb[0].mxu0 %v88
    %v1669 = vpop.f32.mrb[0].mxu0
    %v1670 = vadd.f32 %v351, %v1669
    %v1671 = vpop.f32.mrb[0].mxu0
    %v1672 = vadd.f32 %v355, %v1671
    %v1673 = vpop.f32.mrb[0].mxu0
    %v1674 = vpop.f32.mrb[0].mxu0
    %1675 = vdwg.mxu0
    %1676 = vmatprep.subr.bf16.mxu0 %v1183
    %1677 = vmatpush1.bf16.msra.mxu0 %v1182
    %1678 = vmatprep.subr.bf16.mxu0 %v1187
    %1679 = vmatpush1.bf16.msra.mxu0 %v1186
    %1680 = vmatprep.subr.bf16.mxu0 %v1191
    %1681 = vmatpush1.bf16.msra.mxu0 %v1190
    %1682 = vmatprep.subr.bf16.mxu0 %v1195
    %1683 = vmatpush1.bf16.msra.mxu0 %v1194
    %1684 = vmatprep.subr.bf16.mxu0 %v1199
    %1685 = vmatpush1.bf16.msra.mxu0 %v1198
    %1686 = vmatprep.subr.bf16.mxu0 %v1203
    %1687 = vmatpush1.bf16.msra.mxu0 %v1202
    %1688 = vmatprep.subr.bf16.mxu0 %v1207
    %1689 = vmatpush1.bf16.msra.mxu0 %v1206
    %1690 = vmatprep.subr.bf16.mxu0 %v1211
    %1691 = vmatpush1.bf16.msra.mxu0 %v1210
    %1692 = vmatprep.subr.bf16.mxu0 %v1215
    %1693 = vmatpush1.bf16.msra.mxu0 %v1214
    %1694 = vmatprep.subr.bf16.mxu0 %v1219
    %1695 = vmatpush1.bf16.msra.mxu0 %v1218
    %1696 = vmatprep.subr.bf16.mxu0 %v1223
    %1697 = vmatpush1.bf16.msra.mxu0 %v1222
    %1698 = vmatprep.subr.bf16.mxu0 %v1227
    %1699 = vmatpush1.bf16.msra.mxu0 %v1226
    %1700 = vmatprep.subr.bf16.mxu0 %v1231
    %1701 = vmatpush1.bf16.msra.mxu0 %v1230
    %1702 = vmatprep.subr.bf16.mxu0 %v1235
    %1703 = vmatpush1.bf16.msra.mxu0 %v1234
    %1704 = vmatprep.subr.bf16.mxu0 %v1239
    %1705 = vmatpush1.bf16.msra.mxu0 %v1238
    %1706 = vmatprep.subr.bf16.mxu0 %v1243
    %1707 = vmatpush1.bf16.msra.mxu0 %v1242
    %1708 = vmatprep.mubr.bf16.mxu0 %v91
    %1709 = vmatmul.mubr.bf16.gmra.mrb[0].mxu0 %v90
    %v1710 = vpop.f32.mrb[0].mxu0
    %v1711 = vadd.f32 %v1670, %v1710
    %v1712 = vpop.f32.mrb[0].mxu0
    %v1713 = vadd.f32 %v1672, %v1712
    %v1714 = vpop.f32.mrb[0].mxu0
    %v1715 = vpop.f32.mrb[0].mxu0
    %1716 = vdwg.mxu0
    %1717 = vmatprep.subr.bf16.mxu0 %v1247
    %1718 = vmatpush1.bf16.msra.mxu0 %v1246
    %1719 = vmatprep.subr.bf16.mxu0 %v1251
    %1720 = vmatpush1.bf16.msra.mxu0 %v1250
    %1721 = vmatprep.subr.bf16.mxu0 %v1255
    %1722 = vmatpush1.bf16.msra.mxu0 %v1254
    %1723 = vmatprep.subr.bf16.mxu0 %v1259
    %1724 = vmatpush1.bf16.msra.mxu0 %v1258
    %1725 = vmatprep.subr.bf16.mxu0 %v1263
    %1726 = vmatpush1.bf16.msra.mxu0 %v1262
    %1727 = vmatprep.subr.bf16.mxu0 %v1267
    %1728 = vmatpush1.bf16.msra.mxu0 %v1266
    %1729 = vmatprep.subr.bf16.mxu0 %v1271
    %1730 = vmatpush1.bf16.msra.mxu0 %v1270
    %1731 = vmatprep.subr.bf16.mxu0 %v1275
    %1732 = vmatpush1.bf16.msra.mxu0 %v1274
    %1733 = vmatprep.subr.bf16.mxu0 %v1279
    %1734 = vmatpush1.bf16.msra.mxu0 %v1278
    %1735 = vmatprep.subr.bf16.mxu0 %v1283
    %1736 = vmatpush1.bf16.msra.mxu0 %v1282
    %1737 = vmatprep.subr.bf16.mxu0 %v1287
    %1738 = vmatpush1.bf16.msra.mxu0 %v1286
    %1739 = vmatprep.subr.bf16.mxu0 %v1291
    %1740 = vmatpush1.bf16.msra.mxu0 %v1290
    %1741 = vmatprep.subr.bf16.mxu0 %v1295
    %1742 = vmatpush1.bf16.msra.mxu0 %v1294
    %1743 = vmatprep.subr.bf16.mxu0 %v1299
    %1744 = vmatpush1.bf16.msra.mxu0 %v1298
    %1745 = vmatprep.subr.bf16.mxu0 %v1303
    %1746 = vmatpush1.bf16.msra.mxu0 %v1302
    %1747 = vmatprep.subr.bf16.mxu0 %v1307
    %1748 = vmatpush1.bf16.msra.mxu0 %v1306
    %1749 = vmatprep.mubr.bf16.mxu0 %v93
    %1750 = vmatmul.mubr.bf16.gmra.mrb[0].mxu0 %v92
    %v1751 = vpop.f32.mrb[0].mxu0
    %v1752 = vadd.f32 %v1711, %v1751
    %v1753 = vpop.f32.mrb[0].mxu0
    %v1754 = vadd.f32 %v1713, %v1753
    %v1755 = vpop.f32.mrb[0].mxu0
    %v1756 = vpop.f32.mrb[0].mxu0
    %1757 = vdwg.mxu0
    %1758 = vmatprep.subr.bf16.mxu0 %v1311
    %1759 = vmatpush1.bf16.msra.mxu0 %v1310
    %1760 = vmatprep.subr.bf16.mxu0 %v1315
    %1761 = vmatpush1.bf16.msra.mxu0 %v1314
    %1762 = vmatprep.subr.bf16.mxu0 %v1319
    %1763 = vmatpush1.bf16.msra.mxu0 %v1318
    %1764 = vmatprep.subr.bf16.mxu0 %v1323
    %1765 = vmatpush1.bf16.msra.mxu0 %v1322
    %1766 = vmatprep.subr.bf16.mxu0 %v1327
    %1767 = vmatpush1.bf16.msra.mxu0 %v1326
    %1768 = vmatprep.subr.bf16.mxu0 %v1331
    %1769 = vmatpush1.bf16.msra.mxu0 %v1330
    %1770 = vmatprep.subr.bf16.mxu0 %v1335
    %1771 = vmatpush1.bf16.msra.mxu0 %v1334
    %1772 = vmatprep.subr.bf16.mxu0 %v1339
    %1773 = vmatpush1.bf16.msra.mxu0 %v1338
    %1774 = vmatprep.subr.bf16.mxu0 %v1343
    %1775 = vmatpush1.bf16.msra.mxu0 %v1342
    %1776 = vmatprep.subr.bf16.mxu0 %v1347
    %1777 = vmatpush1.bf16.msra.mxu0 %v1346
    %1778 = vmatprep.subr.bf16.mxu0 %v1351
    %1779 = vmatpush1.bf16.msra.mxu0 %v1350
    %1780 = vmatprep.subr.bf16.mxu0 %v1355
    %1781 = vmatpush1.bf16.msra.mxu0 %v1354
    %1782 = vmatprep.subr.bf16.mxu0 %v1359
    %1783 = vmatpush1.bf16.msra.mxu0 %v1358
    %1784 = vmatprep.subr.bf16.mxu0 %v1363
    %1785 = vmatpush1.bf16.msra.mxu0 %v1362
    %1786 = vmatprep.subr.bf16.mxu0 %v1627
    %1787 = vmatpush1.bf16.msra.mxu0 %v1624
    %1788 = vmatprep.subr.bf16.mxu0 0
    %1789 = vmatpush1.bf16.msra.mxu0 0
    %1790 = vmatprep.mubr.bf16.mxu0 %v1620
    %1791 = vmatmul.mubr.bf16.gmra.mrb[0].mxu0 %v94
    %v1792 = vpop.f32.mrb[0].mxu0
    %v1793 = vadd.f32 %v1752, %v1792
    %v1794 = vpop.f32.mrb[0].mxu0
    %v1795 = vadd.f32 %v1754, %v1794
    %v1796 = vpop.f32.mrb[0].mxu0
    %v1797 = vpop.f32.mrb[0].mxu0
    %1798 = vdwg.mxu0
    %1799 = vmatprep.subr.bf16.mxu0 %v1121
    %1800 = vmatpush1.bf16.msra.mxu0 %v1120
    %1801 = vmatprep.subr.bf16.mxu0 %v1125
    %1802 = vmatpush1.bf16.msra.mxu0 %v1124
    %1803 = vmatprep.subr.bf16.mxu0 %v1129
    %1804 = vmatpush1.bf16.msra.mxu0 %v1128
    %1805 = vmatprep.subr.bf16.mxu0 %v1133
    %1806 = vmatpush1.bf16.msra.mxu0 %v1132
    %1807 = vmatprep.subr.bf16.mxu0 %v1137
    %1808 = vmatpush1.bf16.msra.mxu0 %v1136
    %1809 = vmatprep.subr.bf16.mxu0 %v1141
    %1810 = vmatpush1.bf16.msra.mxu0 %v1140
    %1811 = vmatprep.subr.bf16.mxu0 %v1145
    %1812 = vmatpush1.bf16.msra.mxu0 %v1144
    %1813 = vmatprep.subr.bf16.mxu0 %v1149
    %1814 = vmatpush1.bf16.msra.mxu0 %v1148
    %1815 = vmatprep.subr.bf16.mxu0 %v1153
    %1816 = vmatpush1.bf16.msra.mxu0 %v1152
    %1817 = vmatprep.subr.bf16.mxu0 %v1157
    %1818 = vmatpush1.bf16.msra.mxu0 %v1156
    %1819 = vmatprep.subr.bf16.mxu0 %v1161
    %1820 = vmatpush1.bf16.msra.mxu0 %v1160
    %1821 = vmatprep.subr.bf16.mxu0 %v1165
    %1822 = vmatpush1.bf16.msra.mxu0 %v1164
    %1823 = vmatprep.subr.bf16.mxu0 %v1169
    %1824 = vmatpush1.bf16.msra.mxu0 %v1168
    %1825 = vmatprep.subr.bf16.mxu0 %v1173
    %1826 = vmatpush1.bf16.msra.mxu0 %v1172
    %1827 = vmatprep.subr.bf16.mxu0 %v1177
    %1828 = vmatpush1.bf16.msra.mxu0 %v1176
    %1829 = vmatprep.subr.bf16.mxu0 %v1181
    %1830 = vmatpush1.bf16.msra.mxu0 %v1180
    %1831 = vmatprep.mubr.bf16.mxu0 %v89
    %1832 = vmatmul.mubr.bf16.gmra.mrb[0].mxu0 %v88
    %v1833 = vpop.f32.mrb[0].mxu0
    %v1834 = vadd.f32 %v359, %v1833
    %v1835 = vpop.f32.mrb[0].mxu0
    %v1836 = vadd.f32 %v363, %v1835
    %v1837 = vpop.f32.mrb[0].mxu0
    %v1838 = vpop.f32.mrb[0].mxu0
    %1839 = vdwg.mxu0
    %1840 = vmatprep.subr.bf16.mxu0 %v1185
    %1841 = vmatpush1.bf16.msra.mxu0 %v1184
    %1842 = vmatprep.subr.bf16.mxu0 %v1189
    %1843 = vmatpush1.bf16.msra.mxu0 %v1188
    %1844 = vmatprep.subr.bf16.mxu0 %v1193
    %1845 = vmatpush1.bf16.msra.mxu0 %v1192
    %1846 = vmatprep.subr.bf16.mxu0 %v1197
    %1847 = vmatpush1.bf16.msra.mxu0 %v1196
    %1848 = vmatprep.subr.bf16.mxu0 %v1201
    %1849 = vmatpush1.bf16.msra.mxu0 %v1200
    %1850 = vmatprep.subr.bf16.mxu0 %v1205
    %1851 = vmatpush1.bf16.msra.mxu0 %v1204
    %1852 = vmatprep.subr.bf16.mxu0 %v1209
    %1853 = vmatpush1.bf16.msra.mxu0 %v1208
    %1854 = vmatprep.subr.bf16.mxu0 %v1213
    %1855 = vmatpush1.bf16.msra.mxu0 %v1212
    %1856 = vmatprep.subr.bf16.mxu0 %v1217
    %1857 = vmatpush1.bf16.msra.mxu0 %v1216
    %1858 = vmatprep.subr.bf16.mxu0 %v1221
    %1859 = vmatpush1.bf16.msra.mxu0 %v1220
    %1860 = vmatprep.subr.bf16.mxu0 %v1225
    %1861 = vmatpush1.bf16.msra.mxu0 %v1224
    %1862 = vmatprep.subr.bf16.mxu0 %v1229
    %1863 = vmatpush1.bf16.msra.mxu0 %v1228
    %1864 = vmatprep.subr.bf16.mxu0 %v1233
    %1865 = vmatpush1.bf16.msra.mxu0 %v1232
    %1866 = vmatprep.subr.bf16.mxu0 %v1237
    %1867 = vmatpush1.bf16.msra.mxu0 %v1236
    %1868 = vmatprep.subr.bf16.mxu0 %v1241
    %1869 = vmatpush1.bf16.msra.mxu0 %v1240
    %1870 = vmatprep.subr.bf16.mxu0 %v1245
    %1871 = vmatpush1.bf16.msra.mxu0 %v1244
    %1872 = vmatprep.mubr.bf16.mxu0 %v91
    %1873 = vmatmul.mubr.bf16.gmra.mrb[0].mxu0 %v90
    %v1874 = vpop.f32.mrb[0].mxu0
    %v1875 = vadd.f32 %v1834, %v1874
    %v1876 = vpop.f32.mrb[0].mxu0
    %v1877 = vadd.f32 %v1836, %v1876
    %v1878 = vpop.f32.mrb[0].mxu0
    %v1879 = vpop.f32.mrb[0].mxu0
    %1880 = vdwg.mxu0
    %1881 = vmatprep.subr.bf16.mxu0 %v1249
    %1882 = vmatpush1.bf16.msra.mxu0 %v1248
    %1883 = vmatprep.subr.bf16.mxu0 %v1253
    %1884 = vmatpush1.bf16.msra.mxu0 %v1252
    %1885 = vmatprep.subr.bf16.mxu0 %v1257
    %1886 = vmatpush1.bf16.msra.mxu0 %v1256
    %1887 = vmatprep.subr.bf16.mxu0 %v1261
    %1888 = vmatpush1.bf16.msra.mxu0 %v1260
    %1889 = vmatprep.subr.bf16.mxu0 %v1265
    %1890 = vmatpush1.bf16.msra.mxu0 %v1264
    %1891 = vmatprep.subr.bf16.mxu0 %v1269
    %1892 = vmatpush1.bf16.msra.mxu0 %v1268
    %1893 = vmatprep.subr.bf16.mxu0 %v1273
    %1894 = vmatpush1.bf16.msra.mxu0 %v1272
    %1895 = vmatprep.subr.bf16.mxu0 %v1277
    %1896 = vmatpush1.bf16.msra.mxu0 %v1276
    %1897 = vmatprep.subr.bf16.mxu0 %v1281
    %1898 = vmatpush1.bf16.msra.mxu0 %v1280
    %1899 = vmatprep.subr.bf16.mxu0 %v1285
    %1900 = vmatpush1.bf16.msra.mxu0 %v1284
    %1901 = vmatprep.subr.bf16.mxu0 %v1289
    %1902 = vmatpush1.bf16.msra.mxu0 %v1288
    %1903 = vmatprep.subr.bf16.mxu0 %v1293
    %1904 = vmatpush1.bf16.msra.mxu0 %v1292
    %1905 = vmatprep.subr.bf16.mxu0 %v1297
    %1906 = vmatpush1.bf16.msra.mxu0 %v1296
    %1907 = vmatprep.subr.bf16.mxu0 %v1301
    %1908 = vmatpush1.bf16.msra.mxu0 %v1300
    %1909 = vmatprep.subr.bf16.mxu0 %v1305
    %1910 = vmatpush1.bf16.msra.mxu0 %v1304
    %1911 = vmatprep.subr.bf16.mxu0 %v1309
    %1912 = vmatpush1.bf16.msra.mxu0 %v1308
    %1913 = vmatprep.mubr.bf16.mxu0 %v93
    %1914 = vmatmul.mubr.bf16.gmra.mrb[0].mxu0 %v92
    %v1915 = vpop.f32.mrb[0].mxu0
    %v1916 = vadd.f32 %v1875, %v1915
    %v1917 = vpop.f32.mrb[0].mxu0
    %v1918 = vadd.f32 %v1877, %v1917
    %v1919 = vpop.f32.mrb[0].mxu0
    %v1920 = vpop.f32.mrb[0].mxu0
    %1921 = vdwg.mxu0
    %1922 = vmatprep.subr.bf16.mxu0 %v1313
    %1923 = vmatpush1.bf16.msra.mxu0 %v1312
    %1924 = vmatprep.subr.bf16.mxu0 %v1317
    %1925 = vmatpush1.bf16.msra.mxu0 %v1316
    %1926 = vmatprep.subr.bf16.mxu0 %v1321
    %1927 = vmatpush1.bf16.msra.mxu0 %v1320
    %1928 = vmatprep.subr.bf16.mxu0 %v1325
    %1929 = vmatpush1.bf16.msra.mxu0 %v1324
    %1930 = vmatprep.subr.bf16.mxu0 %v1329
    %1931 = vmatpush1.bf16.msra.mxu0 %v1328
    %1932 = vmatprep.subr.bf16.mxu0 %v1333
    %1933 = vmatpush1.bf16.msra.mxu0 %v1332
    %1934 = vmatprep.subr.bf16.mxu0 %v1337
    %1935 = vmatpush1.bf16.msra.mxu0 %v1336
    %1936 = vmatprep.subr.bf16.mxu0 %v1341
    %1937 = vmatpush1.bf16.msra.mxu0 %v1340
    %1938 = vmatprep.subr.bf16.mxu0 %v1345
    %1939 = vmatpush1.bf16.msra.mxu0 %v1344
    %1940 = vmatprep.subr.bf16.mxu0 %v1349
    %1941 = vmatpush1.bf16.msra.mxu0 %v1348
    %1942 = vmatprep.subr.bf16.mxu0 %v1353
    %1943 = vmatpush1.bf16.msra.mxu0 %v1352
    %1944 = vmatprep.subr.bf16.mxu0 %v1357
    %1945 = vmatpush1.bf16.msra.mxu0 %v1356
    %1946 = vmatprep.subr.bf16.mxu0 %v1361
    %1947 = vmatpush1.bf16.msra.mxu0 %v1360
    %1948 = vmatprep.subr.bf16.mxu0 %v1365
    %1949 = vmatpush1.bf16.msra.mxu0 %v1364
    %1950 = vmatprep.subr.bf16.mxu0 %v1633
    %1951 = vmatpush1.bf16.msra.mxu0 %v1630
    %1952 = vmatprep.subr.bf16.mxu0 0
    %1953 = vmatpush1.bf16.msra.mxu0 0
    %1954 = vmatprep.mubr.bf16.mxu0 %v1620
    %1955 = vmatmul.mubr.bf16.gmra.mrb[0].mxu0 %v94
    %v1956 = vpop.f32.mrb[0].mxu0
    %v1957 = vadd.f32 %v1916, %v1956
    %v1958 = vpop.f32.mrb[0].mxu0
    %v1959 = vadd.f32 %v1918, %v1958
    %v1960 = vpop.f32.mrb[0].mxu0
    %v1961 = vpop.f32.mrb[0].mxu0
    %1962 = vdwg.mxu0
    %v1963 = vmax.f32 %v1793, 0.0
    %v1964 = vmax.f32 %v1795, 0.0
    %v1965 = vmax.f32 %v1957, 0.0
    %v1966 = vmax.f32 %v1959, 0.0
    %v1967 = vpack.c.bf16 %v1963, %v1963
    %v1968 = vpack.c.bf16 %v1964, %v1964
    %v1969 = vpack.c.bf16 %v1965, %v1965
    %v1970 = vpack.c.bf16 %v1966, %v1966
    %v1971 = vld [vmem:[#allocation6] sm:$0xff]
    %v1972 = vld [vmem:[#allocation6 + $0x8] sm:$0xff]
    %v1973 = vld [vmem:[#allocation6 + $0x10] sm:$0xff]
    %v1974 = vld [vmem:[#allocation6 + $0x18] sm:$0xff]
    %v1975 = vld [vmem:[#allocation6 + $0x20] sm:$0xff]
    %v1976 = vld [vmem:[#allocation6 + $0x28] sm:$0xff]
    %v1977 = vld [vmem:[#allocation6 + $0x30] sm:$0xff]
    %v1978 = vld [vmem:[#allocation6 + $0x38] sm:$0xff]
    %v1979 = vld [vmem:[#allocation6 + $0x40] sm:$0xff]
    %v1980 = vld [vmem:[#allocation6 + $0x48] sm:$0xff]
    %v1981 = vld [vmem:[#allocation6 + $0x50] sm:$0xff]
    %v1982 = vld [vmem:[#allocation6 + $0x58] sm:$0xff]
    %v1983 = vld [vmem:[#allocation6 + $0x60] sm:$0xff]
    %v1984 = vld [vmem:[#allocation6 + $0x68] sm:$0xff]
    %v1985 = vld [vmem:[#allocation6 + $0x70] sm:$0xff]
    %v1986 = vld [vmem:[#allocation6 + $0x78] sm:$0xff]
    %v1987 = vld [vmem:[#allocation6 + $0x80] sm:$0xff]
    %v1988 = vld [vmem:[#allocation6 + $0x88] sm:$0xff]
    %v1989 = vld [vmem:[#allocation6 + $0x90] sm:$0xff]
    %v1990 = vld [vmem:[#allocation6 + $0x98] sm:$0xff]
    %v1991 = vld [vmem:[#allocation6 + $0xa0] sm:$0xff]
    %v1992 = vld [vmem:[#allocation6 + $0xa8] sm:$0xff]
    %v1993 = vld [vmem:[#allocation6 + $0xb0] sm:$0xff]
    %v1994 = vld [vmem:[#allocation6 + $0xb8] sm:$0xff]
    %v1995 = vld [vmem:[#allocation6 + $0xc0] sm:$0xff]
    %v1996 = vld [vmem:[#allocation6 + $0xc8] sm:$0xff]
    %v1997 = vld [vmem:[#allocation6 + $0xd0] sm:$0xff]
    %v1998 = vld [vmem:[#allocation6 + $0xd8] sm:$0xff]
    %v1999 = vld [vmem:[#allocation6 + $0xe0] sm:$0xff]
    %v2000 = vld [vmem:[#allocation6 + $0xe8] sm:$0xff]
    %v2001 = vld [vmem:[#allocation6 + $0xf0] sm:$0xff]
    %v2002 = vld [vmem:[#allocation6 + $0xf8] sm:$0xff]
    %v2003 = vld [vmem:[#allocation6 + $0x100] sm:$0xff]
    %v2004 = vld [vmem:[#allocation6 + $0x108] sm:$0xff]
    %v2005 = vld [vmem:[#allocation6 + $0x110] sm:$0xff]
    %v2006 = vld [vmem:[#allocation6 + $0x118] sm:$0xff]
    %v2007 = vld [vmem:[#allocation6 + $0x120] sm:$0xff]
    %v2008 = vld [vmem:[#allocation6 + $0x128] sm:$0xff]
    %v2009 = vld [vmem:[#allocation6 + $0x130] sm:$0xff]
    %v2010 = vld [vmem:[#allocation6 + $0x138] sm:$0xff]
    %v2011 = vld [vmem:[#allocation6 + $0x140] sm:$0xff]
    %v2012 = vld [vmem:[#allocation6 + $0x148] sm:$0xff]
    %v2013 = vld [vmem:[#allocation6 + $0x150] sm:$0xff]
    %v2014 = vld [vmem:[#allocation6 + $0x158] sm:$0xff]
    %v2015 = vld [vmem:[#allocation6 + $0x160] sm:$0xff]
    %v2016 = vld [vmem:[#allocation6 + $0x168] sm:$0xff]
    %v2017 = vld [vmem:[#allocation6 + $0x170] sm:$0xff]
    %v2018 = vld [vmem:[#allocation6 + $0x178] sm:$0xff]
    %v2019 = vld [vmem:[#allocation6 + $0x180] sm:$0xff]
    %v2020 = vld [vmem:[#allocation6 + $0x188] sm:$0xff]
    %v2021 = vld [vmem:[#allocation6 + $0x190] sm:$0xff]
    %v2022 = vld [vmem:[#allocation6 + $0x198] sm:$0xff]
    %v2023 = vld [vmem:[#allocation6 + $0x1a0] sm:$0xff]
    %v2024 = vld [vmem:[#allocation6 + $0x1a8] sm:$0xff]
    %v2025 = vld [vmem:[#allocation6 + $0x1b0] sm:$0xff]
    %v2026 = vld [vmem:[#allocation6 + $0x1b8] sm:$0xff]
    %v2027 = vld [vmem:[#allocation6 + $0x1c0] sm:$0xff]
    %v2028 = vld [vmem:[#allocation6 + $0x1c8] sm:$0xff]
    %v2029 = vld [vmem:[#allocation6 + $0x1d0] sm:$0xff]
    %v2030 = vld [vmem:[#allocation6 + $0x1d8] sm:$0xff]
    %v2031 = vld [vmem:[#allocation6 + $0x1e0] sm:$0xff]
    %v2032 = vld [vmem:[#allocation6 + $0x1e8] sm:$0xff]
    %v2033 = vld [vmem:[#allocation6 + $0x1f0] sm:$0xff]
    %v2034 = vld [vmem:[#allocation6 + $0x1f8] sm:$0xff]
    %v2035 = vld [vmem:[#allocation6 + $0x200] sm:$0xff]
    %v2036 = vld [vmem:[#allocation6 + $0x208] sm:$0xff]
    %v2037 = vld [vmem:[#allocation6 + $0x210] sm:$0xff]
    %v2038 = vld [vmem:[#allocation6 + $0x218] sm:$0xff]
    %v2039 = vld [vmem:[#allocation6 + $0x220] sm:$0xff]
    %v2040 = vld [vmem:[#allocation6 + $0x228] sm:$0xff]
    %v2041 = vld [vmem:[#allocation6 + $0x230] sm:$0xff]
    %v2042 = vld [vmem:[#allocation6 + $0x238] sm:$0xff]
    %v2043 = vld [vmem:[#allocation6 + $0x240] sm:$0xff]
    %v2044 = vld [vmem:[#allocation6 + $0x248] sm:$0xff]
    %v2045 = vld [vmem:[#allocation6 + $0x250] sm:$0xff]
    %v2046 = vld [vmem:[#allocation6 + $0x258] sm:$0xff]
    %v2047 = vld [vmem:[#allocation6 + $0x260] sm:$0xff]
    %v2048 = vld [vmem:[#allocation6 + $0x268] sm:$0xff]
    %v2049 = vld [vmem:[#allocation6 + $0x270] sm:$0xff]
    %v2050 = vld [vmem:[#allocation6 + $0x278] sm:$0xff]
    %v2051 = vld [vmem:[#allocation6 + $0x280] sm:$0xff]
    %v2052 = vld [vmem:[#allocation6 + $0x288] sm:$0xff]
    %v2053 = vld [vmem:[#allocation6 + $0x290] sm:$0xff]
    %v2054 = vld [vmem:[#allocation6 + $0x298] sm:$0xff]
    %v2055 = vld [vmem:[#allocation6 + $0x2a0] sm:$0xff]
    %v2056 = vld [vmem:[#allocation6 + $0x2a8] sm:$0xff]
    %v2057 = vld [vmem:[#allocation6 + $0x2b0] sm:$0xff]
    %v2058 = vld [vmem:[#allocation6 + $0x2b8] sm:$0xff]
    %v2059 = vld [vmem:[#allocation6 + $0x2c0] sm:$0xff]
    %v2060 = vld [vmem:[#allocation6 + $0x2c8] sm:$0xff]
    %v2061 = vld [vmem:[#allocation6 + $0x2d0] sm:$0xff]
    %v2062 = vld [vmem:[#allocation6 + $0x2d8] sm:$0xff]
    %v2063 = vld [vmem:[#allocation6 + $0x2e0] sm:$0xff]
    %v2064 = vld [vmem:[#allocation6 + $0x2e8] sm:$0xff]
    %v2065 = vld [vmem:[#allocation6 + $0x2f0] sm:$0xff]
    %v2066 = vld [vmem:[#allocation6 + $0x2f8] sm:$0xff]
    %v2067 = vld [vmem:[#allocation6 + $0x300] sm:$0xff]
    %v2068 = vld [vmem:[#allocation6 + $0x308] sm:$0xff]
    %v2069 = vld [vmem:[#allocation6 + $0x310] sm:$0xff]
    %v2070 = vld [vmem:[#allocation6 + $0x318] sm:$0xff]
    %v2071 = vld [vmem:[#allocation6 + $0x320] sm:$0xff]
    %v2072 = vld [vmem:[#allocation6 + $0x328] sm:$0xff]
    %v2073 = vld [vmem:[#allocation6 + $0x330] sm:$0xff]
    %v2074 = vld [vmem:[#allocation6 + $0x338] sm:$0xff]
    %v2075 = vld [vmem:[#allocation6 + $0x340] sm:$0xff]
    %v2076 = vld [vmem:[#allocation6 + $0x348] sm:$0xff]
    %v2077 = vld [vmem:[#allocation6 + $0x350] sm:$0xff]
    %v2078 = vld [vmem:[#allocation6 + $0x358] sm:$0xff]
    %v2079 = vld [vmem:[#allocation6 + $0x360] sm:$0xff]
    %v2080 = vld [vmem:[#allocation6 + $0x368] sm:$0xff]
    %v2081 = vld [vmem:[#allocation6 + $0x370] sm:$0xff]
    %v2082 = vld [vmem:[#allocation6 + $0x378] sm:$0xff]
    %v2083 = vld [vmem:[#allocation6 + $0x380] sm:$0xff]
    %v2084 = vld [vmem:[#allocation6 + $0x388] sm:$0xff]
    %v2085 = vld [vmem:[#allocation6 + $0x390] sm:$0xff]
    %v2086 = vld [vmem:[#allocation6 + $0x398] sm:$0xff]
    %v2087 = vld [vmem:[#allocation6 + $0x3a0] sm:$0xff]
    %v2088 = vld [vmem:[#allocation6 + $0x3a8] sm:$0xff]
    %v2089 = vld [vmem:[#allocation6 + $0x3b0] sm:$0xff]
    %v2090 = vld [vmem:[#allocation6 + $0x3b8] sm:$0xff]
    %v2091 = vld [vmem:[#allocation6 + $0x3c0] sm:$0xff]
    %v2092 = vld [vmem:[#allocation6 + $0x3c8] sm:$0xff]
    %v2093 = vld [vmem:[#allocation6 + $0x3d0] sm:$0xff]
    %v2094 = vld [vmem:[#allocation6 + $0x3d8] sm:$0xff]
    %v2095 = vld [vmem:[#allocation6 + $0x3e0] sm:$0xff]
    %v2096 = vld [vmem:[#allocation6 + $0x3e8] sm:$0xff]
    %v2097 = vld [vmem:[#allocation6 + $0x3f0] sm:$0xff]
    %v2098 = vld [vmem:[#allocation6 + $0x3f8] sm:$0xff]
    %v2099 = vld [vmem:[%s4] sm:$0xf]
    %v2101 = vlaneseq
    %v2102 = vshrl.u32 %v2101, 7
    %v2103 = vsub.s32 0, %v2102
    %v2104 = vrot.slane %v2099, %v2103
    %v2105 = vlaneseq
    %v2106 = vshrl.u32 %v2105, 7
    %v2107 = vsub.s32 1, %v2106
    %v2108 = vrot.slane %v2099, %v2107
    %v2109 = vlaneseq
    %v2110 = vshrl.u32 %v2109, 7
    %v2111 = vsub.s32 2, %v2110
    %v2112 = vrot.slane %v2099, %v2111
    %v2113 = vlaneseq
    %v2114 = vshrl.u32 %v2113, 7
    %v2115 = vsub.s32 3, %v2114
    %v2116 = vrot.slane %v2099, %v2115
    %v2249 = vunpack.c.l.b16 %v1971
    %v2250 = vunpack.c.h.b16 %v1971
    %v2251 = vunpack.c.l.b16 %v1972
    %v2252 = vunpack.c.h.b16 %v1972
    %v2253 = vunpack.c.l.b16 %v1973
    %v2254 = vunpack.c.h.b16 %v1973
    %v2255 = vunpack.c.l.b16 %v1974
    %v2256 = vunpack.c.h.b16 %v1974
    %v2257 = vunpack.c.l.b16 %v1975
    %v2258 = vunpack.c.h.b16 %v1975
    %v2259 = vunpack.c.l.b16 %v1976
    %v2260 = vunpack.c.h.b16 %v1976
    %v2261 = vunpack.c.l.b16 %v1977
    %v2262 = vunpack.c.h.b16 %v1977
    %v2263 = vunpack.c.l.b16 %v1978
    %v2264 = vunpack.c.h.b16 %v1978
    %v2265 = vunpack.c.l.b16 %v1979
    %v2266 = vunpack.c.h.b16 %v1979
    %v2267 = vunpack.c.l.b16 %v1980
    %v2268 = vunpack.c.h.b16 %v1980
    %v2269 = vunpack.c.l.b16 %v1981
    %v2270 = vunpack.c.h.b16 %v1981
    %v2271 = vunpack.c.l.b16 %v1982
    %v2272 = vunpack.c.h.b16 %v1982
    %v2273 = vunpack.c.l.b16 %v1983
    %v2274 = vunpack.c.h.b16 %v1983
    %v2275 = vunpack.c.l.b16 %v1984
    %v2276 = vunpack.c.h.b16 %v1984
    %v2277 = vunpack.c.l.b16 %v1985
    %v2278 = vunpack.c.h.b16 %v1985
    %v2279 = vunpack.c.l.b16 %v1986
    %v2280 = vunpack.c.h.b16 %v1986
    %v2281 = vunpack.c.l.b16 %v1987
    %v2282 = vunpack.c.h.b16 %v1987
    %v2283 = vunpack.c.l.b16 %v1988
    %v2284 = vunpack.c.h.b16 %v1988
    %v2285 = vunpack.c.l.b16 %v1989
    %v2286 = vunpack.c.h.b16 %v1989
    %v2287 = vunpack.c.l.b16 %v1990
    %v2288 = vunpack.c.h.b16 %v1990
    %v2289 = vunpack.c.l.b16 %v1991
    %v2290 = vunpack.c.h.b16 %v1991
    %v2291 = vunpack.c.l.b16 %v1992
    %v2292 = vunpack.c.h.b16 %v1992
    %v2293 = vunpack.c.l.b16 %v1993
    %v2294 = vunpack.c.h.b16 %v1993
    %v2295 = vunpack.c.l.b16 %v1994
    %v2296 = vunpack.c.h.b16 %v1994
    %v2297 = vunpack.c.l.b16 %v1995
    %v2298 = vunpack.c.h.b16 %v1995
    %v2299 = vunpack.c.l.b16 %v1996
    %v2300 = vunpack.c.h.b16 %v1996
    %v2301 = vunpack.c.l.b16 %v1997
    %v2302 = vunpack.c.h.b16 %v1997
    %v2303 = vunpack.c.l.b16 %v1998
    %v2304 = vunpack.c.h.b16 %v1998
    %v2305 = vunpack.c.l.b16 %v1999
    %v2306 = vunpack.c.h.b16 %v1999
    %v2307 = vunpack.c.l.b16 %v2000
    %v2308 = vunpack.c.h.b16 %v2000
    %v2309 = vunpack.c.l.b16 %v2001
    %v2310 = vunpack.c.h.b16 %v2001
    %v2311 = vunpack.c.l.b16 %v2002
    %v2312 = vunpack.c.h.b16 %v2002
    %v2313 = vunpack.c.l.b16 %v2003
    %v2314 = vunpack.c.h.b16 %v2003
    %v2315 = vunpack.c.l.b16 %v2004
    %v2316 = vunpack.c.h.b16 %v2004
    %v2317 = vunpack.c.l.b16 %v2005
    %v2318 = vunpack.c.h.b16 %v2005
    %v2319 = vunpack.c.l.b16 %v2006
    %v2320 = vunpack.c.h.b16 %v2006
    %v2321 = vunpack.c.l.b16 %v2007
    %v2322 = vunpack.c.h.b16 %v2007
    %v2323 = vunpack.c.l.b16 %v2008
    %v2324 = vunpack.c.h.b16 %v2008
    %v2325 = vunpack.c.l.b16 %v2009
    %v2326 = vunpack.c.h.b16 %v2009
    %v2327 = vunpack.c.l.b16 %v2010
    %v2328 = vunpack.c.h.b16 %v2010
    %v2329 = vunpack.c.l.b16 %v2011
    %v2330 = vunpack.c.h.b16 %v2011
    %v2331 = vunpack.c.l.b16 %v2012
    %v2332 = vunpack.c.h.b16 %v2012
    %v2333 = vunpack.c.l.b16 %v2013
    %v2334 = vunpack.c.h.b16 %v2013
    %v2335 = vunpack.c.l.b16 %v2014
    %v2336 = vunpack.c.h.b16 %v2014
    %v2337 = vunpack.c.l.b16 %v2015
    %v2338 = vunpack.c.h.b16 %v2015
    %v2339 = vunpack.c.l.b16 %v2016
    %v2340 = vunpack.c.h.b16 %v2016
    %v2341 = vunpack.c.l.b16 %v2017
    %v2342 = vunpack.c.h.b16 %v2017
    %v2343 = vunpack.c.l.b16 %v2018
    %v2344 = vunpack.c.h.b16 %v2018
    %v2345 = vunpack.c.l.b16 %v2019
    %v2346 = vunpack.c.h.b16 %v2019
    %v2347 = vunpack.c.l.b16 %v2020
    %v2348 = vunpack.c.h.b16 %v2020
    %v2349 = vunpack.c.l.b16 %v2021
    %v2350 = vunpack.c.h.b16 %v2021
    %v2351 = vunpack.c.l.b16 %v2022
    %v2352 = vunpack.c.h.b16 %v2022
    %v2353 = vunpack.c.l.b16 %v2023
    %v2354 = vunpack.c.h.b16 %v2023
    %v2355 = vunpack.c.l.b16 %v2024
    %v2356 = vunpack.c.h.b16 %v2024
    %v2357 = vunpack.c.l.b16 %v2025
    %v2358 = vunpack.c.h.b16 %v2025
    %v2359 = vunpack.c.l.b16 %v2026
    %v2360 = vunpack.c.h.b16 %v2026
    %v2361 = vunpack.c.l.b16 %v2027
    %v2362 = vunpack.c.h.b16 %v2027
    %v2363 = vunpack.c.l.b16 %v2028
    %v2364 = vunpack.c.h.b16 %v2028
    %v2365 = vunpack.c.l.b16 %v2029
    %v2366 = vunpack.c.h.b16 %v2029
    %v2367 = vunpack.c.l.b16 %v2030
    %v2368 = vunpack.c.h.b16 %v2030
    %v2369 = vunpack.c.l.b16 %v2031
    %v2370 = vunpack.c.h.b16 %v2031
    %v2371 = vunpack.c.l.b16 %v2032
    %v2372 = vunpack.c.h.b16 %v2032
    %v2373 = vunpack.c.l.b16 %v2033
    %v2374 = vunpack.c.h.b16 %v2033
    %v2375 = vunpack.c.l.b16 %v2034
    %v2376 = vunpack.c.h.b16 %v2034
    %v2377 = vunpack.c.l.b16 %v2035
    %v2378 = vunpack.c.h.b16 %v2035
    %v2379 = vunpack.c.l.b16 %v2036
    %v2380 = vunpack.c.h.b16 %v2036
    %v2381 = vunpack.c.l.b16 %v2037
    %v2382 = vunpack.c.h.b16 %v2037
    %v2383 = vunpack.c.l.b16 %v2038
    %v2384 = vunpack.c.h.b16 %v2038
    %v2385 = vunpack.c.l.b16 %v2039
    %v2386 = vunpack.c.h.b16 %v2039
    %v2387 = vunpack.c.l.b16 %v2040
    %v2388 = vunpack.c.h.b16 %v2040
    %v2389 = vunpack.c.l.b16 %v2041
    %v2390 = vunpack.c.h.b16 %v2041
    %v2391 = vunpack.c.l.b16 %v2042
    %v2392 = vunpack.c.h.b16 %v2042
    %v2393 = vunpack.c.l.b16 %v2043
    %v2394 = vunpack.c.h.b16 %v2043
    %v2395 = vunpack.c.l.b16 %v2044
    %v2396 = vunpack.c.h.b16 %v2044
    %v2397 = vunpack.c.l.b16 %v2045
    %v2398 = vunpack.c.h.b16 %v2045
    %v2399 = vunpack.c.l.b16 %v2046
    %v2400 = vunpack.c.h.b16 %v2046
    %v2401 = vunpack.c.l.b16 %v2047
    %v2402 = vunpack.c.h.b16 %v2047
    %v2403 = vunpack.c.l.b16 %v2048
    %v2404 = vunpack.c.h.b16 %v2048
    %v2405 = vunpack.c.l.b16 %v2049
    %v2406 = vunpack.c.h.b16 %v2049
    %v2407 = vunpack.c.l.b16 %v2050
    %v2408 = vunpack.c.h.b16 %v2050
    %v2409 = vunpack.c.l.b16 %v2051
    %v2410 = vunpack.c.h.b16 %v2051
    %v2411 = vunpack.c.l.b16 %v2052
    %v2412 = vunpack.c.h.b16 %v2052
    %v2413 = vunpack.c.l.b16 %v2053
    %v2414 = vunpack.c.h.b16 %v2053
    %v2415 = vunpack.c.l.b16 %v2054
    %v2416 = vunpack.c.h.b16 %v2054
    %v2417 = vunpack.c.l.b16 %v2055
    %v2418 = vunpack.c.h.b16 %v2055
    %v2419 = vunpack.c.l.b16 %v2056
    %v2420 = vunpack.c.h.b16 %v2056
    %v2421 = vunpack.c.l.b16 %v2057
    %v2422 = vunpack.c.h.b16 %v2057
    %v2423 = vunpack.c.l.b16 %v2058
    %v2424 = vunpack.c.h.b16 %v2058
    %v2425 = vunpack.c.l.b16 %v2059
    %v2426 = vunpack.c.h.b16 %v2059
    %v2427 = vunpack.c.l.b16 %v2060
    %v2428 = vunpack.c.h.b16 %v2060
    %v2429 = vunpack.c.l.b16 %v2061
    %v2430 = vunpack.c.h.b16 %v2061
    %v2431 = vunpack.c.l.b16 %v2062
    %v2432 = vunpack.c.h.b16 %v2062
    %v2433 = vunpack.c.l.b16 %v2063
    %v2434 = vunpack.c.h.b16 %v2063
    %v2435 = vunpack.c.l.b16 %v2064
    %v2436 = vunpack.c.h.b16 %v2064
    %v2437 = vunpack.c.l.b16 %v2065
    %v2438 = vunpack.c.h.b16 %v2065
    %v2439 = vunpack.c.l.b16 %v2066
    %v2440 = vunpack.c.h.b16 %v2066
    %v2441 = vunpack.c.l.b16 %v2067
    %v2442 = vunpack.c.h.b16 %v2067
    %v2443 = vunpack.c.l.b16 %v2068
    %v2444 = vunpack.c.h.b16 %v2068
    %v2445 = vunpack.c.l.b16 %v2069
    %v2446 = vunpack.c.h.b16 %v2069
    %v2447 = vunpack.c.l.b16 %v2070
    %v2448 = vunpack.c.h.b16 %v2070
    %v2449 = vunpack.c.l.b16 %v2071
    %v2450 = vunpack.c.h.b16 %v2071
    %v2451 = vunpack.c.l.b16 %v2072
    %v2452 = vunpack.c.h.b16 %v2072
    %v2453 = vunpack.c.l.b16 %v2073
    %v2454 = vunpack.c.h.b16 %v2073
    %v2455 = vunpack.c.l.b16 %v2074
    %v2456 = vunpack.c.h.b16 %v2074
    %v2457 = vunpack.c.l.b16 %v2075
    %v2458 = vunpack.c.h.b16 %v2075
    %v2459 = vunpack.c.l.b16 %v2076
    %v2460 = vunpack.c.h.b16 %v2076
    %v2461 = vunpack.c.l.b16 %v2077
    %v2462 = vunpack.c.h.b16 %v2077
    %v2463 = vunpack.c.l.b16 %v2078
    %v2464 = vunpack.c.h.b16 %v2078
    %v2465 = vunpack.c.l.b16 %v2079
    %v2466 = vunpack.c.h.b16 %v2079
    %v2467 = vunpack.c.l.b16 %v2080
    %v2468 = vunpack.c.h.b16 %v2080
    %v2469 = vunpack.c.l.b16 %v2081
    %v2470 = vunpack.c.h.b16 %v2081
    %v2471 = vunpack.c.l.b16 %v2082
    %v2472 = vunpack.c.h.b16 %v2082
    %v2473 = vunpack.c.l.b16 %v2083
    %v2474 = vunpack.c.h.b16 %v2083
    %v2475 = vunpack.c.l.b16 %v2084
    %v2476 = vunpack.c.h.b16 %v2084
    %v2477 = vunpack.c.l.b16 %v2085
    %v2478 = vunpack.c.h.b16 %v2085
    %v2479 = vunpack.c.l.b16 %v2086
    %v2480 = vunpack.c.h.b16 %v2086
    %v2481 = vunpack.c.l.b16 %v2087
    %v2482 = vunpack.c.h.b16 %v2087
    %v2483 = vunpack.c.l.b16 %v2088
    %v2484 = vunpack.c.h.b16 %v2088
    %v2485 = vunpack.c.l.b16 %v2089
    %v2486 = vunpack.c.h.b16 %v2089
    %v2487 = vunpack.c.l.b16 %v2090
    %v2488 = vunpack.c.h.b16 %v2090
    %v2489 = vunpack.c.l.b16 %v2091
    %v2490 = vunpack.c.h.b16 %v2091
    %v2491 = vunpack.c.l.b16 %v2092
    %v2492 = vunpack.c.h.b16 %v2092
    %v2493 = vunpack.c.l.b16 %v2093
    %v2494 = vunpack.c.h.b16 %v2093
    %v2495 = vunpack.c.l.b16 %v2094
    %v2496 = vunpack.c.h.b16 %v2094
    %v2497 = vunpack.c.l.b16 %v2095
    %v2498 = vunpack.c.h.b16 %v2095
    %v2499 = vunpack.c.l.b16 %v2096
    %v2500 = vunpack.c.h.b16 %v2096
    %v2501 = vunpack.c.l.b16 %v2097
    %v2502 = vunpack.c.h.b16 %v2097
    %v2503 = vunpack.c.l.b16 %v2098
    %v2504 = vunpack.c.h.b16 %v2098
    %v2505 = vpack.c.b16 %v2253, %v2249
    %v2506 = vpack.c.b16 %v2254, %v2250
    %v2507 = vpack.c.b16 %v2255, %v2251
    %v2508 = vpack.c.b16 %v2256, %v2252
    %v2509 = vpack.c.b16 %v2261, %v2257
    %v2510 = vpack.c.b16 %v2262, %v2258
    %v2511 = vpack.c.b16 %v2263, %v2259
    %v2512 = vpack.c.b16 %v2264, %v2260
    %v2513 = vpack.c.b16 %v2269, %v2265
    %v2514 = vpack.c.b16 %v2270, %v2266
    %v2515 = vpack.c.b16 %v2271, %v2267
    %v2516 = vpack.c.b16 %v2272, %v2268
    %v2517 = vpack.c.b16 %v2277, %v2273
    %v2518 = vpack.c.b16 %v2278, %v2274
    %v2519 = vpack.c.b16 %v2279, %v2275
    %v2520 = vpack.c.b16 %v2280, %v2276
    %v2521 = vpack.c.b16 %v2285, %v2281
    %v2522 = vpack.c.b16 %v2286, %v2282
    %v2523 = vpack.c.b16 %v2287, %v2283
    %v2524 = vpack.c.b16 %v2288, %v2284
    %v2525 = vpack.c.b16 %v2293, %v2289
    %v2526 = vpack.c.b16 %v2294, %v2290
    %v2527 = vpack.c.b16 %v2295, %v2291
    %v2528 = vpack.c.b16 %v2296, %v2292
    %v2529 = vpack.c.b16 %v2301, %v2297
    %v2530 = vpack.c.b16 %v2302, %v2298
    %v2531 = vpack.c.b16 %v2303, %v2299
    %v2532 = vpack.c.b16 %v2304, %v2300
    %v2533 = vpack.c.b16 %v2309, %v2305
    %v2534 = vpack.c.b16 %v2310, %v2306
    %v2535 = vpack.c.b16 %v2311, %v2307
    %v2536 = vpack.c.b16 %v2312, %v2308
    %v2537 = vpack.c.b16 %v2317, %v2313
    %v2538 = vpack.c.b16 %v2318, %v2314
    %v2539 = vpack.c.b16 %v2319, %v2315
    %v2540 = vpack.c.b16 %v2320, %v2316
    %v2541 = vpack.c.b16 %v2325, %v2321
    %v2542 = vpack.c.b16 %v2326, %v2322
    %v2543 = vpack.c.b16 %v2327, %v2323
    %v2544 = vpack.c.b16 %v2328, %v2324
    %v2545 = vpack.c.b16 %v2333, %v2329
    %v2546 = vpack.c.b16 %v2334, %v2330
    %v2547 = vpack.c.b16 %v2335, %v2331
    %v2548 = vpack.c.b16 %v2336, %v2332
    %v2549 = vpack.c.b16 %v2341, %v2337
    %v2550 = vpack.c.b16 %v2342, %v2338
    %v2551 = vpack.c.b16 %v2343, %v2339
    %v2552 = vpack.c.b16 %v2344, %v2340
    %v2553 = vpack.c.b16 %v2349, %v2345
    %v2554 = vpack.c.b16 %v2350, %v2346
    %v2555 = vpack.c.b16 %v2351, %v2347
    %v2556 = vpack.c.b16 %v2352, %v2348
    %v2557 = vpack.c.b16 %v2357, %v2353
    %v2558 = vpack.c.b16 %v2358, %v2354
    %v2559 = vpack.c.b16 %v2359, %v2355
    %v2560 = vpack.c.b16 %v2360, %v2356
    %v2561 = vpack.c.b16 %v2365, %v2361
    %v2562 = vpack.c.b16 %v2366, %v2362
    %v2563 = vpack.c.b16 %v2367, %v2363
    %v2564 = vpack.c.b16 %v2368, %v2364
    %v2565 = vpack.c.b16 %v2373, %v2369
    %v2566 = vpack.c.b16 %v2374, %v2370
    %v2567 = vpack.c.b16 %v2375, %v2371
    %v2568 = vpack.c.b16 %v2376, %v2372
    %v2569 = vpack.c.b16 %v2381, %v2377
    %v2570 = vpack.c.b16 %v2382, %v2378
    %v2571 = vpack.c.b16 %v2383, %v2379
    %v2572 = vpack.c.b16 %v2384, %v2380
    %v2573 = vpack.c.b16 %v2389, %v2385
    %v2574 = vpack.c.b16 %v2390, %v2386
    %v2575 = vpack.c.b16 %v2391, %v2387
    %v2576 = vpack.c.b16 %v2392, %v2388
    %v2577 = vpack.c.b16 %v2397, %v2393
    %v2578 = vpack.c.b16 %v2398, %v2394
    %v2579 = vpack.c.b16 %v2399, %v2395
    %v2580 = vpack.c.b16 %v2400, %v2396
    %v2581 = vpack.c.b16 %v2405, %v2401
    %v2582 = vpack.c.b16 %v2406, %v2402
    %v2583 = vpack.c.b16 %v2407, %v2403
    %v2584 = vpack.c.b16 %v2408, %v2404
    %v2585 = vpack.c.b16 %v2413, %v2409
    %v2586 = vpack.c.b16 %v2414, %v2410
    %v2587 = vpack.c.b16 %v2415, %v2411
    %v2588 = vpack.c.b16 %v2416, %v2412
    %v2589 = vpack.c.b16 %v2421, %v2417
    %v2590 = vpack.c.b16 %v2422, %v2418
    %v2591 = vpack.c.b16 %v2423, %v2419
    %v2592 = vpack.c.b16 %v2424, %v2420
    %v2593 = vpack.c.b16 %v2429, %v2425
    %v2594 = vpack.c.b16 %v2430, %v2426
    %v2595 = vpack.c.b16 %v2431, %v2427
    %v2596 = vpack.c.b16 %v2432, %v2428
    %v2597 = vpack.c.b16 %v2437, %v2433
    %v2598 = vpack.c.b16 %v2438, %v2434
    %v2599 = vpack.c.b16 %v2439, %v2435
    %v2600 = vpack.c.b16 %v2440, %v2436
    %v2601 = vpack.c.b16 %v2445, %v2441
    %v2602 = vpack.c.b16 %v2446, %v2442
    %v2603 = vpack.c.b16 %v2447, %v2443
    %v2604 = vpack.c.b16 %v2448, %v2444
    %v2605 = vpack.c.b16 %v2453, %v2449
    %v2606 = vpack.c.b16 %v2454, %v2450
    %v2607 = vpack.c.b16 %v2455, %v2451
    %v2608 = vpack.c.b16 %v2456, %v2452
    %v2609 = vpack.c.b16 %v2461, %v2457
    %v2610 = vpack.c.b16 %v2462, %v2458
    %v2611 = vpack.c.b16 %v2463, %v2459
    %v2612 = vpack.c.b16 %v2464, %v2460
    %v2613 = vpack.c.b16 %v2469, %v2465
    %v2614 = vpack.c.b16 %v2470, %v2466
    %v2615 = vpack.c.b16 %v2471, %v2467
    %v2616 = vpack.c.b16 %v2472, %v2468
    %v2617 = vpack.c.b16 %v2477, %v2473
    %v2618 = vpack.c.b16 %v2478, %v2474
    %v2619 = vpack.c.b16 %v2479, %v2475
    %v2620 = vpack.c.b16 %v2480, %v2476
    %v2621 = vpack.c.b16 %v2485, %v2481
    %v2622 = vpack.c.b16 %v2486, %v2482
    %v2623 = vpack.c.b16 %v2487, %v2483
    %v2624 = vpack.c.b16 %v2488, %v2484
    %v2625 = vpack.c.b16 %v2493, %v2489
    %v2626 = vpack.c.b16 %v2494, %v2490
    %v2627 = vpack.c.b16 %v2495, %v2491
    %v2628 = vpack.c.b16 %v2496, %v2492
    %v2629 = vpack.c.b16 %v2501, %v2497
    %v2630 = vpack.c.b16 %v2502, %v2498
    %v2631 = vpack.c.b16 %v2503, %v2499
    %v2632 = vpack.c.b16 %v2504, %v2500
    %2761 = vmatprep.subr.bf16.mxu0 %v2506
    %2762 = vmatpush1.bf16.msra.mxu0 %v2505
    %2763 = vmatprep.subr.bf16.mxu0 %v2510
    %2764 = vmatpush1.bf16.msra.mxu0 %v2509
    %2765 = vmatprep.subr.bf16.mxu0 %v2514
    %2766 = vmatpush1.bf16.msra.mxu0 %v2513
    %2767 = vmatprep.subr.bf16.mxu0 %v2518
    %2768 = vmatpush1.bf16.msra.mxu0 %v2517
    %2769 = vmatprep.subr.bf16.mxu0 %v2522
    %2770 = vmatpush1.bf16.msra.mxu0 %v2521
    %2771 = vmatprep.subr.bf16.mxu0 %v2526
    %2772 = vmatpush1.bf16.msra.mxu0 %v2525
    %2773 = vmatprep.subr.bf16.mxu0 %v2530
    %2774 = vmatpush1.bf16.msra.mxu0 %v2529
    %2775 = vmatprep.subr.bf16.mxu0 %v2534
    %2776 = vmatpush1.bf16.msra.mxu0 %v2533
    %2777 = vmatprep.subr.bf16.mxu0 %v2538
    %2778 = vmatpush1.bf16.msra.mxu0 %v2537
    %2779 = vmatprep.subr.bf16.mxu0 %v2542
    %2780 = vmatpush1.bf16.msra.mxu0 %v2541
    %2781 = vmatprep.subr.bf16.mxu0 %v2546
    %2782 = vmatpush1.bf16.msra.mxu0 %v2545
    %2783 = vmatprep.subr.bf16.mxu0 %v2550
    %2784 = vmatpush1.bf16.msra.mxu0 %v2549
    %2785 = vmatprep.subr.bf16.mxu0 %v2554
    %2786 = vmatpush1.bf16.msra.mxu0 %v2553
    %2787 = vmatprep.subr.bf16.mxu0 %v2558
    %2788 = vmatpush1.bf16.msra.mxu0 %v2557
    %2789 = vmatprep.subr.bf16.mxu0 %v2562
    %2790 = vmatpush1.bf16.msra.mxu0 %v2561
    %2791 = vmatprep.subr.bf16.mxu0 %v2566
    %2792 = vmatpush1.bf16.msra.mxu0 %v2565
    %2793 = vmatprep.mubr.bf16.mxu0 %v1968
    %2794 = vmatmul.mubr.bf16.gmra.mrb[0].mxu0 %v1967
    %v2795 = vpop.f32.mrb[0].mxu0
    %v2796 = vadd.f32 %v2104, %v2795
    %v2797 = vpop.f32.mrb[0].mxu0
    %v2798 = vadd.f32 %v2108, %v2797
    %v2799 = vpop.f32.mrb[0].mxu0
    %v2800 = vpop.f32.mrb[0].mxu0
    %2801 = vdwg.mxu0
    %2802 = vmatprep.subr.bf16.mxu0 %v2570
    %2803 = vmatpush1.bf16.msra.mxu0 %v2569
    %2804 = vmatprep.subr.bf16.mxu0 %v2574
    %2805 = vmatpush1.bf16.msra.mxu0 %v2573
    %2806 = vmatprep.subr.bf16.mxu0 %v2578
    %2807 = vmatpush1.bf16.msra.mxu0 %v2577
    %2808 = vmatprep.subr.bf16.mxu0 %v2582
    %2809 = vmatpush1.bf16.msra.mxu0 %v2581
    %2810 = vmatprep.subr.bf16.mxu0 %v2586
    %2811 = vmatpush1.bf16.msra.mxu0 %v2585
    %2812 = vmatprep.subr.bf16.mxu0 %v2590
    %2813 = vmatpush1.bf16.msra.mxu0 %v2589
    %2814 = vmatprep.subr.bf16.mxu0 %v2594
    %2815 = vmatpush1.bf16.msra.mxu0 %v2593
    %2816 = vmatprep.subr.bf16.mxu0 %v2598
    %2817 = vmatpush1.bf16.msra.mxu0 %v2597
    %2818 = vmatprep.subr.bf16.mxu0 %v2602
    %2819 = vmatpush1.bf16.msra.mxu0 %v2601
    %2820 = vmatprep.subr.bf16.mxu0 %v2606
    %2821 = vmatpush1.bf16.msra.mxu0 %v2605
    %2822 = vmatprep.subr.bf16.mxu0 %v2610
    %2823 = vmatpush1.bf16.msra.mxu0 %v2609
    %2824 = vmatprep.subr.bf16.mxu0 %v2614
    %2825 = vmatpush1.bf16.msra.mxu0 %v2613
    %2826 = vmatprep.subr.bf16.mxu0 %v2618
    %2827 = vmatpush1.bf16.msra.mxu0 %v2617
    %2828 = vmatprep.subr.bf16.mxu0 %v2622
    %2829 = vmatpush1.bf16.msra.mxu0 %v2621
    %2830 = vmatprep.subr.bf16.mxu0 %v2626
    %2831 = vmatpush1.bf16.msra.mxu0 %v2625
    %2832 = vmatprep.subr.bf16.mxu0 %v2630
    %2833 = vmatpush1.bf16.msra.mxu0 %v2629
    %2834 = vmatprep.mubr.bf16.mxu0 %v1970
    %2835 = vmatmul.mubr.bf16.gmra.mrb[0].mxu0 %v1969
    %v2836 = vpop.f32.mrb[0].mxu0
    %v2837 = vadd.f32 %v2796, %v2836
    %v2838 = vpop.f32.mrb[0].mxu0
    %v2839 = vadd.f32 %v2798, %v2838
    %v2840 = vpop.f32.mrb[0].mxu0
    %v2841 = vpop.f32.mrb[0].mxu0
    %2842 = vdwg.mxu0
    %2843 = vmatprep.subr.bf16.mxu0 %v2508
    %2844 = vmatpush1.bf16.msra.mxu0 %v2507
    %2845 = vmatprep.subr.bf16.mxu0 %v2512
    %2846 = vmatpush1.bf16.msra.mxu0 %v2511
    %2847 = vmatprep.subr.bf16.mxu0 %v2516
    %2848 = vmatpush1.bf16.msra.mxu0 %v2515
    %2849 = vmatprep.subr.bf16.mxu0 %v2520
    %2850 = vmatpush1.bf16.msra.mxu0 %v2519
    %2851 = vmatprep.subr.bf16.mxu0 %v2524
    %2852 = vmatpush1.bf16.msra.mxu0 %v2523
    %2853 = vmatprep.subr.bf16.mxu0 %v2528
    %2854 = vmatpush1.bf16.msra.mxu0 %v2527
    %2855 = vmatprep.subr.bf16.mxu0 %v2532
    %2856 = vmatpush1.bf16.msra.mxu0 %v2531
    %2857 = vmatprep.subr.bf16.mxu0 %v2536
    %2858 = vmatpush1.bf16.msra.mxu0 %v2535
    %2859 = vmatprep.subr.bf16.mxu0 %v2540
    %2860 = vmatpush1.bf16.msra.mxu0 %v2539
    %2861 = vmatprep.subr.bf16.mxu0 %v2544
    %2862 = vmatpush1.bf16.msra.mxu0 %v2543
    %2863 = vmatprep.subr.bf16.mxu0 %v2548
    %2864 = vmatpush1.bf16.msra.mxu0 %v2547
    %2865 = vmatprep.subr.bf16.mxu0 %v2552
    %2866 = vmatpush1.bf16.msra.mxu0 %v2551
    %2867 = vmatprep.subr.bf16.mxu0 %v2556
    %2868 = vmatpush1.bf16.msra.mxu0 %v2555
    %2869 = vmatprep.subr.bf16.mxu0 %v2560
    %2870 = vmatpush1.bf16.msra.mxu0 %v2559
    %2871 = vmatprep.subr.bf16.mxu0 %v2564
    %2872 = vmatpush1.bf16.msra.mxu0 %v2563
    %2873 = vmatprep.subr.bf16.mxu0 %v2568
    %2874 = vmatpush1.bf16.msra.mxu0 %v2567
    %2875 = vmatprep.mubr.bf16.mxu0 %v1968
    %2876 = vmatmul.mubr.bf16.gmra.mrb[0].mxu0 %v1967
    %v2877 = vpop.f32.mrb[0].mxu0
    %v2878 = vadd.f32 %v2112, %v2877
    %v2879 = vpop.f32.mrb[0].mxu0
    %v2880 = vadd.f32 %v2116, %v2879
    %v2881 = vpop.f32.mrb[0].mxu0
    %v2882 = vpop.f32.mrb[0].mxu0
    %2883 = vdwg.mxu0
    %2884 = vmatprep.subr.bf16.mxu0 %v2572
    %2885 = vmatpush1.bf16.msra.mxu0 %v2571
    %2886 = vmatprep.subr.bf16.mxu0 %v2576
    %2887 = vmatpush1.bf16.msra.mxu0 %v2575
    %2888 = vmatprep.subr.bf16.mxu0 %v2580
    %2889 = vmatpush1.bf16.msra.mxu0 %v2579
    %2890 = vmatprep.subr.bf16.mxu0 %v2584
    %2891 = vmatpush1.bf16.msra.mxu0 %v2583
    %2892 = vmatprep.subr.bf16.mxu0 %v2588
    %2893 = vmatpush1.bf16.msra.mxu0 %v2587
    %2894 = vmatprep.subr.bf16.mxu0 %v2592
    %2895 = vmatpush1.bf16.msra.mxu0 %v2591
    %2896 = vmatprep.subr.bf16.mxu0 %v2596
    %2897 = vmatpush1.bf16.msra.mxu0 %v2595
    %2898 = vmatprep.subr.bf16.mxu0 %v2600
    %2899 = vmatpush1.bf16.msra.mxu0 %v2599
    %2900 = vmatprep.subr.bf16.mxu0 %v2604
    %2901 = vmatpush1.bf16.msra.mxu0 %v2603
    %2902 = vmatprep.subr.bf16.mxu0 %v2608
    %2903 = vmatpush1.bf16.msra.mxu0 %v2607
    %2904 = vmatprep.subr.bf16.mxu0 %v2612
    %2905 = vmatpush1.bf16.msra.mxu0 %v2611
    %2906 = vmatprep.subr.bf16.mxu0 %v2616
    %2907 = vmatpush1.bf16.msra.mxu0 %v2615
    %2908 = vmatprep.subr.bf16.mxu0 %v2620
    %2909 = vmatpush1.bf16.msra.mxu0 %v2619
    %2910 = vmatprep.subr.bf16.mxu0 %v2624
    %2911 = vmatpush1.bf16.msra.mxu0 %v2623
    %2912 = vmatprep.subr.bf16.mxu0 %v2628
    %2913 = vmatpush1.bf16.msra.mxu0 %v2627
    %2914 = vmatprep.subr.bf16.mxu0 %v2632
    %2915 = vmatpush1.bf16.msra.mxu0 %v2631
    %2916 = vmatprep.mubr.bf16.mxu0 %v1970
    %2917 = vmatmul.mubr.bf16.gmra.mrb[0].mxu0 %v1969
    %v2918 = vpop.f32.mrb[0].mxu0
    %v2919 = vadd.f32 %v2878, %v2918
    %v2920 = vpop.f32.mrb[0].mxu0
    %v2921 = vadd.f32 %v2880, %v2920
    %v2922 = vpop.f32.mrb[0].mxu0
    %v2923 = vpop.f32.mrb[0].mxu0
    %2924 = vdwg.mxu0
    %v2925 = vmax.f32 %v2837, 0.0
    %v2926 = vmax.f32 %v2839, 0.0
    %v2927 = vmax.f32 %v2919, 0.0
    %v2928 = vmax.f32 %v2921, 0.0
    %v2929 = vpack.c.bf16 %v2925, %v2925
    %v2930 = vpack.c.bf16 %v2926, %v2926
    %v2931 = vpack.c.bf16 %v2927, %v2927
    %v2932 = vpack.c.bf16 %v2928, %v2928
    %v2933 = vld [vmem:[#allocation7] sm:$0xf]
    %v2934 = vld [vmem:[#allocation7 + $0x4] sm:$0xf]
    %v2935 = vld [vmem:[#allocation7 + $0x8] sm:$0xf]
    %v2936 = vld [vmem:[#allocation7 + $0xc] sm:$0xf]
    %v2937 = vld [vmem:[#allocation7 + $0x10] sm:$0xf]
    %v2938 = vld [vmem:[#allocation7 + $0x14] sm:$0xf]
    %v2939 = vld [vmem:[#allocation7 + $0x18] sm:$0xf]
    %v2940 = vld [vmem:[#allocation7 + $0x1c] sm:$0xf]
    %v2941 = vld [vmem:[#allocation7 + $0x20] sm:$0xf]
    %v2942 = vld [vmem:[#allocation7 + $0x24] sm:$0xf]
    %v2943 = vld [vmem:[#allocation7 + $0x28] sm:$0xf]
    %v2944 = vld [vmem:[#allocation7 + $0x2c] sm:$0xf]
    %v2945 = vld [vmem:[#allocation7 + $0x30] sm:$0xf]
    %v2946 = vld [vmem:[#allocation7 + $0x34] sm:$0xf]
    %v2947 = vld [vmem:[#allocation7 + $0x38] sm:$0xf]
    %v2948 = vld [vmem:[#allocation7 + $0x3c] sm:$0xf]
    %v2949 = vld [vmem:[#allocation7 + $0x40] sm:$0xf]
    %v2950 = vld [vmem:[#allocation7 + $0x44] sm:$0xf]
    %v2951 = vld [vmem:[#allocation7 + $0x48] sm:$0xf]
    %v2952 = vld [vmem:[#allocation7 + $0x4c] sm:$0xf]
    %v2953 = vld [vmem:[#allocation7 + $0x50] sm:$0xf]
    %v2954 = vld [vmem:[#allocation7 + $0x54] sm:$0xf]
    %v2955 = vld [vmem:[#allocation7 + $0x58] sm:$0xf]
    %v2956 = vld [vmem:[#allocation7 + $0x5c] sm:$0xf]
    %v2957 = vld [vmem:[#allocation7 + $0x60] sm:$0xf]
    %v2958 = vld [vmem:[#allocation7 + $0x64] sm:$0xf]
    %v2959 = vld [vmem:[#allocation7 + $0x68] sm:$0xf]
    %v2960 = vld [vmem:[#allocation7 + $0x6c] sm:$0xf]
    %v2961 = vld [vmem:[#allocation7 + $0x70] sm:$0xf]
    %v2962 = vld [vmem:[#allocation7 + $0x74] sm:$0xf]
    %v2963 = vld [vmem:[#allocation7 + $0x78] sm:$0xf]
    %v2964 = vld [vmem:[#allocation7 + $0x7c] sm:$0xf]
    %v2965 = vld [vmem:[#allocation7 + $0x80] sm:$0xf]
    %v2966 = vld [vmem:[#allocation7 + $0x84] sm:$0xf]
    %v2967 = vld [vmem:[#allocation7 + $0x88] sm:$0xf]
    %v2968 = vld [vmem:[#allocation7 + $0x8c] sm:$0xf]
    %v2969 = vld [vmem:[#allocation7 + $0x90] sm:$0xf]
    %v2970 = vld [vmem:[#allocation7 + $0x94] sm:$0xf]
    %v2971 = vld [vmem:[#allocation7 + $0x98] sm:$0xf]
    %v2972 = vld [vmem:[#allocation7 + $0x9c] sm:$0xf]
    %v2973 = vld [vmem:[#allocation7 + $0xa0] sm:$0xf]
    %v2974 = vld [vmem:[#allocation7 + $0xa4] sm:$0xf]
    %v2975 = vld [vmem:[#allocation7 + $0xa8] sm:$0xf]
    %v2976 = vld [vmem:[#allocation7 + $0xac] sm:$0xf]
    %v2977 = vld [vmem:[#allocation7 + $0xb0] sm:$0xf]
    %v2978 = vld [vmem:[#allocation7 + $0xb4] sm:$0xf]
    %v2979 = vld [vmem:[#allocation7 + $0xb8] sm:$0xf]
    %v2980 = vld [vmem:[#allocation7 + $0xbc] sm:$0xf]
    %v2981 = vld [vmem:[#allocation7 + $0xc0] sm:$0xf]
    %v2982 = vld [vmem:[#allocation7 + $0xc4] sm:$0xf]
    %v2983 = vld [vmem:[#allocation7 + $0xc8] sm:$0xf]
    %v2984 = vld [vmem:[#allocation7 + $0xcc] sm:$0xf]
    %v2985 = vld [vmem:[#allocation7 + $0xd0] sm:$0xf]
    %v2986 = vld [vmem:[#allocation7 + $0xd4] sm:$0xf]
    %v2987 = vld [vmem:[#allocation7 + $0xd8] sm:$0xf]
    %v2988 = vld [vmem:[#allocation7 + $0xdc] sm:$0xf]
    %v2989 = vld [vmem:[#allocation7 + $0xe0] sm:$0xf]
    %v2990 = vld [vmem:[#allocation7 + $0xe4] sm:$0xf]
    %v2991 = vld [vmem:[#allocation7 + $0xe8] sm:$0xf]
    %v2992 = vld [vmem:[#allocation7 + $0xec] sm:$0xf]
    %v2993 = vld [vmem:[#allocation7 + $0xf0] sm:$0xf]
    %v2994 = vld [vmem:[#allocation7 + $0xf4] sm:$0xf]
    %v2995 = vld [vmem:[#allocation7 + $0xf8] sm:$0xf]
    %v2996 = vld [vmem:[#allocation7 + $0xfc] sm:$0xf]
    %v2997 = vld [vmem:[%s6] sm:$0x1]
    %v2999 = vlaneseq
    %v3000 = vshrl.u32 %v2999, 7
    %v3001 = vsub.s32 0, %v3000
    %v3002 = vrot.slane %v2997, %v3001
    %v3068 = vunpack.c.l.b16 %v2933
    %v3069 = vunpack.c.l.b16 %v2934
    %v3070 = vunpack.c.l.b16 %v2935
    %v3071 = vunpack.c.l.b16 %v2936
    %v3072 = vunpack.c.l.b16 %v2937
    %v3073 = vunpack.c.l.b16 %v2938
    %v3074 = vunpack.c.l.b16 %v2939
    %v3075 = vunpack.c.l.b16 %v2940
    %v3076 = vunpack.c.l.b16 %v2941
    %v3077 = vunpack.c.l.b16 %v2942
    %v3078 = vunpack.c.l.b16 %v2943
    %v3079 = vunpack.c.l.b16 %v2944
    %v3080 = vunpack.c.l.b16 %v2945
    %v3081 = vunpack.c.l.b16 %v2946
    %v3082 = vunpack.c.l.b16 %v2947
    %v3083 = vunpack.c.l.b16 %v2948
    %v3084 = vunpack.c.l.b16 %v2949
    %v3085 = vunpack.c.l.b16 %v2950
    %v3086 = vunpack.c.l.b16 %v2951
    %v3087 = vunpack.c.l.b16 %v2952
    %v3088 = vunpack.c.l.b16 %v2953
    %v3089 = vunpack.c.l.b16 %v2954
    %v3090 = vunpack.c.l.b16 %v2955
    %v3091 = vunpack.c.l.b16 %v2956
    %v3092 = vunpack.c.l.b16 %v2957
    %v3093 = vunpack.c.l.b16 %v2958
    %v3094 = vunpack.c.l.b16 %v2959
    %v3095 = vunpack.c.l.b16 %v2960
    %v3096 = vunpack.c.l.b16 %v2961
    %v3097 = vunpack.c.l.b16 %v2962
    %v3098 = vunpack.c.l.b16 %v2963
    %v3099 = vunpack.c.l.b16 %v2964
    %v3100 = vunpack.c.l.b16 %v2965
    %v3101 = vunpack.c.l.b16 %v2966
    %v3102 = vunpack.c.l.b16 %v2967
    %v3103 = vunpack.c.l.b16 %v2968
    %v3104 = vunpack.c.l.b16 %v2969
    %v3105 = vunpack.c.l.b16 %v2970
    %v3106 = vunpack.c.l.b16 %v2971
    %v3107 = vunpack.c.l.b16 %v2972
    %v3108 = vunpack.c.l.b16 %v2973
    %v3109 = vunpack.c.l.b16 %v2974
    %v3110 = vunpack.c.l.b16 %v2975
    %v3111 = vunpack.c.l.b16 %v2976
    %v3112 = vunpack.c.l.b16 %v2977
    %v3113 = vunpack.c.l.b16 %v2978
    %v3114 = vunpack.c.l.b16 %v2979
    %v3115 = vunpack.c.l.b16 %v2980
    %v3116 = vunpack.c.l.b16 %v2981
    %v3117 = vunpack.c.l.b16 %v2982
    %v3118 = vunpack.c.l.b16 %v2983
    %v3119 = vunpack.c.l.b16 %v2984
    %v3120 = vunpack.c.l.b16 %v2985
    %v3121 = vunpack.c.l.b16 %v2986
    %v3122 = vunpack.c.l.b16 %v2987
    %v3123 = vunpack.c.l.b16 %v2988
    %v3124 = vunpack.c.l.b16 %v2989
    %v3125 = vunpack.c.l.b16 %v2990
    %v3126 = vunpack.c.l.b16 %v2991
    %v3127 = vunpack.c.l.b16 %v2992
    %v3128 = vunpack.c.l.b16 %v2993
    %v3129 = vunpack.c.l.b16 %v2994
    %v3130 = vunpack.c.l.b16 %v2995
    %v3131 = vunpack.c.l.b16 %v2996
    %v3132 = vpack.c.b16 %v3069, %v3068
    %v3133 = vpack.c.b16 %v3071, %v3070
    %v3134 = vpack.c.b16 %v3073, %v3072
    %v3135 = vpack.c.b16 %v3075, %v3074
    %v3136 = vpack.c.b16 %v3077, %v3076
    %v3137 = vpack.c.b16 %v3079, %v3078
    %v3138 = vpack.c.b16 %v3081, %v3080
    %v3139 = vpack.c.b16 %v3083, %v3082
    %v3140 = vpack.c.b16 %v3085, %v3084
    %v3141 = vpack.c.b16 %v3087, %v3086
    %v3142 = vpack.c.b16 %v3089, %v3088
    %v3143 = vpack.c.b16 %v3091, %v3090
    %v3144 = vpack.c.b16 %v3093, %v3092
    %v3145 = vpack.c.b16 %v3095, %v3094
    %v3146 = vpack.c.b16 %v3097, %v3096
    %v3147 = vpack.c.b16 %v3099, %v3098
    %v3148 = vpack.c.b16 %v3101, %v3100
    %v3149 = vpack.c.b16 %v3103, %v3102
    %v3150 = vpack.c.b16 %v3105, %v3104
    %v3151 = vpack.c.b16 %v3107, %v3106
    %v3152 = vpack.c.b16 %v3109, %v3108
    %v3153 = vpack.c.b16 %v3111, %v3110
    %v3154 = vpack.c.b16 %v3113, %v3112
    %v3155 = vpack.c.b16 %v3115, %v3114
    %v3156 = vpack.c.b16 %v3117, %v3116
    %v3157 = vpack.c.b16 %v3119, %v3118
    %v3158 = vpack.c.b16 %v3121, %v3120
    %v3159 = vpack.c.b16 %v3123, %v3122
    %v3160 = vpack.c.b16 %v3125, %v3124
    %v3161 = vpack.c.b16 %v3127, %v3126
    %v3162 = vpack.c.b16 %v3129, %v3128
    %v3163 = vpack.c.b16 %v3131, %v3130
    %3196 = vmatprep.subr.bf16.mxu0 0
    %3197 = vmatpush1.bf16.msra.mxu0 %v3132
    %3198 = vmatprep.subr.bf16.mxu0 0
    %3199 = vmatpush1.bf16.msra.mxu0 %v3133
    %3200 = vmatprep.subr.bf16.mxu0 0
    %3201 = vmatpush1.bf16.msra.mxu0 %v3134
    %3202 = vmatprep.subr.bf16.mxu0 0
    %3203 = vmatpush1.bf16.msra.mxu0 %v3135
    %3204 = vmatprep.subr.bf16.mxu0 0
    %3205 = vmatpush1.bf16.msra.mxu0 %v3136
    %3206 = vmatprep.subr.bf16.mxu0 0
    %3207 = vmatpush1.bf16.msra.mxu0 %v3137
    %3208 = vmatprep.subr.bf16.mxu0 0
    %3209 = vmatpush1.bf16.msra.mxu0 %v3138
    %3210 = vmatprep.subr.bf16.mxu0 0
    %3211 = vmatpush1.bf16.msra.mxu0 %v3139
    %3212 = vmatprep.subr.bf16.mxu0 0
    %3213 = vmatpush1.bf16.msra.mxu0 %v3140
    %3214 = vmatprep.subr.bf16.mxu0 0
    %3215 = vmatpush1.bf16.msra.mxu0 %v3141
    %3216 = vmatprep.subr.bf16.mxu0 0
    %3217 = vmatpush1.bf16.msra.mxu0 %v3142
    %3218 = vmatprep.subr.bf16.mxu0 0
    %3219 = vmatpush1.bf16.msra.mxu0 %v3143
    %3220 = vmatprep.subr.bf16.mxu0 0
    %3221 = vmatpush1.bf16.msra.mxu0 %v3144
    %3222 = vmatprep.subr.bf16.mxu0 0
    %3223 = vmatpush1.bf16.msra.mxu0 %v3145
    %3224 = vmatprep.subr.bf16.mxu0 0
    %3225 = vmatpush1.bf16.msra.mxu0 %v3146
    %3226 = vmatprep.subr.bf16.mxu0 0
    %3227 = vmatpush1.bf16.msra.mxu0 %v3147
    %3228 = vmatprep.mubr.bf16.mxu0 %v2930
    %3229 = vmatmul.mubr.bf16.gmra.mrb[0].mxu0 %v2929
    %v3230 = vpop.f32.mrb[0].mxu0
    %v3231 = vadd.f32 %v3002, %v3230
    %v3232 = vpop.f32.mrb[0].mxu0
    %v3233 = vpop.f32.mrb[0].mxu0
    %v3234 = vpop.f32.mrb[0].mxu0
    %3235 = vdwg.mxu0
    %3236 = vmatprep.subr.bf16.mxu0 0
    %3237 = vmatpush1.bf16.msra.mxu0 %v3148
    %3238 = vmatprep.subr.bf16.mxu0 0
    %3239 = vmatpush1.bf16.msra.mxu0 %v3149
    %3240 = vmatprep.subr.bf16.mxu0 0
    %3241 = vmatpush1.bf16.msra.mxu0 %v3150
    %3242 = vmatprep.subr.bf16.mxu0 0
    %3243 = vmatpush1.bf16.msra.mxu0 %v3151
    %3244 = vmatprep.subr.bf16.mxu0 0
    %3245 = vmatpush1.bf16.msra.mxu0 %v3152
    %3246 = vmatprep.subr.bf16.mxu0 0
    %3247 = vmatpush1.bf16.msra.mxu0 %v3153
    %3248 = vmatprep.subr.bf16.mxu0 0
    %3249 = vmatpush1.bf16.msra.mxu0 %v3154
    %3250 = vmatprep.subr.bf16.mxu0 0
    %3251 = vmatpush1.bf16.msra.mxu0 %v3155
    %3252 = vmatprep.subr.bf16.mxu0 0
    %3253 = vmatpush1.bf16.msra.mxu0 %v3156
    %3254 = vmatprep.subr.bf16.mxu0 0
    %3255 = vmatpush1.bf16.msra.mxu0 %v3157
    %3256 = vmatprep.subr.bf16.mxu0 0
    %3257 = vmatpush1.bf16.msra.mxu0 %v3158
    %3258 = vmatprep.subr.bf16.mxu0 0
    %3259 = vmatpush1.bf16.msra.mxu0 %v3159
    %3260 = vmatprep.subr.bf16.mxu0 0
    %3261 = vmatpush1.bf16.msra.mxu0 %v3160
    %3262 = vmatprep.subr.bf16.mxu0 0
    %3263 = vmatpush1.bf16.msra.mxu0 %v3161
    %3264 = vmatprep.subr.bf16.mxu0 0
    %3265 = vmatpush1.bf16.msra.mxu0 %v3162
    %3266 = vmatprep.subr.bf16.mxu0 0
    %3267 = vmatpush1.bf16.msra.mxu0 %v3163
    %3268 = vmatprep.mubr.bf16.mxu0 %v2932
    %3269 = vmatmul.mubr.bf16.gmra.mrb[0].mxu0 %v2931
    %v3270 = vpop.f32.mrb[0].mxu0
    %v3271 = vadd.f32 %v3231, %v3270
    %v3272 = vpop.f32.mrb[0].mxu0
    %v3273 = vpop.f32.mrb[0].mxu0
    %v3274 = vpop.f32.mrb[0].mxu0
    %3275 = vdwg.mxu0
    %v3276 = vpack.c.bf16 %v3271, %v3271
    %3277 = vst [vmem:[%s7] sm:$0xf] %v3276
    // Predicated region
    $region46: #{score_forward.1} parent=1 // pred_check
      _
    $region47: #{score_forward.1} parent=1 // pred_check_branch
      %3279 = sbr.rel (0) target = $region49
    $region48: #{score_forward.1} parent=1 // pred_region
      _
    $region49: #{score_forward.1} parent=1 // pred_fallthru
      _
    // Predicated region
    $region50: #{score_forward.1} parent=1 // pred_check
      _
    $region51: #{score_forward.1} parent=1 // pred_check_branch
      %3281 = sbr.rel (0) target = $region53
    $region52: #{score_forward.1} parent=1 // pred_region
      _
    $region53: #{score_forward.1} parent=1 // pred_fallthru
      _
    %3282 = vsyncpa [#allocation3], 1
    %3283 = vsyncpa [#allocation5], 1
    %3284 = vsyncpa [#allocation8], 1

</llo_original>
